<compile_context>
chip_gen: v7x
topology: tpu7x:2x2x1
jax: 0.10.0
libtpu: 0.0.40
codegen_flags: <defaults>
</compile_context>

<pallas_src>
import numpy as np
import jax
import jax.numpy as jnp
from jax.experimental import pallas as pl
from jax.experimental.pallas import tpu as pltpu


def make_resample_kernel(k):
    """Make the 2D resampling kernel from a 1D magnitude list (numpy f32)."""
    k = np.asarray(k, dtype=np.float64)
    if k.ndim == 1:
        k = np.outer(k, k)
    k = k / k.sum()
    return k.astype(np.float32)


def _vmem_bytes(shape, dtype):
    """Rough VMEM footprint of one block after (sublane, lane) tile padding."""
    itemsize = np.dtype(dtype).itemsize
    packing = max(1, 4 // itemsize)            # sub-32-bit dtypes pack sublanes
    if len(shape) < 2:
        return max(int(np.prod(shape, dtype=np.int64)) * itemsize, 512)
    lead = int(np.prod(shape[:-2], dtype=np.int64)) if len(shape) > 2 else 1
    sub = -(-int(shape[-2]) // (8 * packing)) * (8 * packing)
    lane = -(-int(shape[-1]) // 128) * 128
    return int(lead * sub * lane * itemsize)


def _lane_util(n):
    """Fraction of a 128-wide lane tile actually used by a last dim of size n."""
    return float(n) / float(pl.cdiv(int(n), 128) * 128)


def _band_matrix(taps, in_len, out_len, pad0):
    """(in_len, out_len) banded-Toeplitz matrix T with zero-padding baked in:
    (x @ T)[..., c] == sum_j taps[j] * zero_pad(x, pad0, pad1)[..., c + j]."""
    kt = len(taps)
    t = np.zeros((in_len, out_len), dtype=np.float64)
    for c in range(out_len):
        for j in range(kt):
            w = c + j - pad0
            if 0 <= w < in_len:
                t[w, c] = taps[j]
    return t


def _upfirdn_planes(x, taps, p0, p1, sdt, budget, vmem_limit):
    """Plane layout (N*C, H, W), W on lanes.  Horizontal FIR as a banded-
    Toeplitz matmul on the MXU (pad baked into the band); vertical FIR as
    sublane-offset Ref reads from a halo-only-zeroed scratch."""
    N, C, H, W = map(int, x.shape)
    kt = len(taps)
    Ho = H + p0 + p1 - kt + 1
    Wo = W + p0 + p1 - kt + 1
    Hv = H + p0 + p1
    in_dt = x.dtype

    B = N * C
    x_flat = x.reshape(B, H, W)                                  # free reshape
    tw = jnp.asarray(_band_matrix(taps, W, Wo, p0), dtype=sdt)   # (W, Wo)

    per_plane = (
        2 * _vmem_bytes((1, H, W), in_dt)                 # dbl-buffered input
        + 2 * _vmem_bytes((1, Ho, Wo), in_dt)             # dbl-buffered output
        + _vmem_bytes((1, Hv, Wo), sdt)                   # vertical-halo scratch
        + 3 * _vmem_bytes((1, Hv, Wo), jnp.float32)       # matmul/bcast/acc live
    )
    cb = max(1, budget // max(per_plane, 1))
    if B > 1:
        cb = min(cb, pl.cdiv(B, 2))     # >= 2 grid steps: both v7x TCs get work
    Cb = int(min(B, cb))
    grid = (pl.cdiv(B, Cb),)

    def kernel(x_ref, tw_ref, o_ref, tmp_ref):
        # Horizontal FIR on the (otherwise idle) MXU: x @ band.  The zero-pad is
        # baked into the band, so no lane shifts and no W zero-fill are needed.
        tw_b = jnp.broadcast_to(tw_ref[...], (Cb, W, Wo))
        h1 = jnp.einsum('chw,cwo->cho', x_ref[...], tw_b,
                        preferred_element_type=jnp.float32,
                        precision=jax.lax.Precision.HIGHEST)      # (Cb, H, Wo)

        # Vertical zero-pad: halo rows only; the interior is fully overwritten
        # every step (never gated on program_id -> safe under "parallel").
        if p0 > 0:
            tmp_ref[:, 0:p0, :] = jnp.zeros((Cb, p0, Wo), tmp_ref.dtype)
        if p1 > 0:
            tmp_ref[:, p0 + H:Hv, :] = jnp.zeros((Cb, p1, Wo), tmp_ref.dtype)
        tmp_ref[:, p0:p0 + H, :] = h1.astype(tmp_ref.dtype)

        # Vertical FIR: sublane-offset reads straight from the Ref (address
        # arithmetic, no full-block reload / value-slice sublane shifts).
        acc = None
        for i, t in enumerate(taps):
            if t == 0.0:
                continue
            term = t * tmp_ref[:, pl.ds(i, Ho), :].astype(jnp.float32)
            acc = term if acc is None else acc + term
        if acc is None:
            acc = jnp.zeros((Cb, Ho, Wo), jnp.float32)
        o_ref[...] = acc.astype(o_ref.dtype)

    cost = pl.CostEstimate(
        flops=int(2 * B * H * W * Wo + 2 * B * kt * Ho * Wo),
        transcendentals=0,
        bytes_accessed=int(B * (H * W + Ho * Wo) * np.dtype(in_dt).itemsize),
    )
    out_flat = pl.pallas_call(
        kernel,
        out_shape=jax.ShapeDtypeStruct((B, Ho, Wo), in_dt),
        grid=grid,
        in_specs=[pl.BlockSpec((Cb, H, W), lambda b: (b, 0, 0)),
                  pl.BlockSpec((W, Wo), lambda b: (0, 0))],
        out_specs=pl.BlockSpec((Cb, Ho, Wo), lambda b: (b, 0, 0)),
        scratch_shapes=[pltpu.VMEM((Cb, Hv, Wo), sdt)],
        compiler_params=pltpu.CompilerParams(
            dimension_semantics=("parallel",),
            vmem_limit_bytes=vmem_limit),
        cost_estimate=cost,
    )(x_flat, tw)
    return out_flat.reshape(N, C, Ho, Wo)


def _upfirdn_channels_last(x, taps, p0, p1, sdt, budget, vmem_limit):
    """Channels-last layout (N, H, W, C), C on the 128-lane axis: lane-dense
    output stores for production channel counts; tap shifts are leading/sublane
    Ref address arithmetic; fused zero-pad with halo-only zero-fill."""
    N, C, H, W = map(int, x.shape)
    kt = len(taps)
    Hp, Wp = H + p0 + p1, W + p0 + p1
    Ho, Wo = Hp - kt + 1, Wp - kt + 1
    in_dt = x.dtype

    # TODO(synk): the NCHW<->NHWC transposes are wrapper-level XLA copies; in a
    # fully channels-last VQFR pipeline they disappear.
    x_cl = jnp.transpose(x, (0, 2, 3, 1))                       # (N, H, W, C)

    per_image = (
        2 * _vmem_bytes((1, H, W, C), in_dt)
        + 2 * _vmem_bytes((1, Ho, Wo, C), in_dt)
        + _vmem_bytes((1, Hp, Wp, C), sdt)
        + _vmem_bytes((1, Hp, Wo, C), sdt)
        + 2 * _vmem_bytes((1, Hp, Wo, C), jnp.float32))
    nb = max(1, budget // max(per_image, 1))
    if N > 1:
        nb = min(nb, pl.cdiv(N, 2))     # >= 2 grid steps: both v7x TCs get work
    Nb = int(min(N, nb))
    grid = (pl.cdiv(N, Nb),)

    def kernel(x_ref, o_ref, pad_ref, tmp_ref):
        sd = pad_ref.dtype
        # Fused zero-pad, halo strips only (interior fully overwritten each
        # step; never gated on program_id so parallel grids stay correct).
        if p0 > 0:
            pad_ref[:, 0:p0, :, :] = jnp.zeros((Nb, p0, Wp, C), sd)
            pad_ref[:, p0:p0 + H, 0:p0, :] = jnp.zeros((Nb, H, p0, C), sd)
        if p1 > 0:
            pad_ref[:, p0 + H:Hp, :, :] = jnp.zeros((Nb, p1, Wp, C), sd)
            pad_ref[:, p0:p0 + H, p0 + W:Wp, :] = jnp.zeros((Nb, H, p1, C), sd)
        pad_ref[:, p0:p0 + H, p0:p0 + W, :] = x_ref[...].astype(sd)

        # Horizontal FIR: W sits on sublanes -> tap shifts are Ref address math.
        acc = None
        for j, t in enumerate(taps):
            if t == 0.0:
                continue
            term = t * pad_ref[:, :, pl.ds(j, Wo), :].astype(jnp.float32)
            acc = term if acc is None else acc + term
        if acc is None:
            acc = jnp.zeros((Nb, Hp, Wo, C), jnp.float32)
        tmp_ref[...] = acc.astype(sd)

        # Vertical FIR: H is a leading dim of the Ref -> free addressing.
        out = None
        for i, t in enumerate(taps):
            if t == 0.0:
                continue
            term = t * tmp_ref[:, pl.ds(i, Ho), :, :].astype(jnp.float32)
            out = term if out is None else out + term
        if out is None:
            out = jnp.zeros((Nb, Ho, Wo, C), jnp.float32)
        o_ref[...] = out.astype(o_ref.dtype)

    cost = pl.CostEstimate(
        flops=int(2 * N * C * kt * (Hp * Wo + Ho * Wo)),
        transcendentals=0,
        bytes_accessed=int(N * C * (H * W + Ho * Wo) * np.dtype(in_dt).itemsize),
    )
    out_cl = pl.pallas_call(
        kernel,
        out_shape=jax.ShapeDtypeStruct((N, Ho, Wo, C), in_dt),
        grid=grid,
        in_specs=[pl.BlockSpec((Nb, H, W, C), lambda n: (n, 0, 0, 0))],
        out_specs=pl.BlockSpec((Nb, Ho, Wo, C), lambda n: (n, 0, 0, 0)),
        scratch_shapes=[pltpu.VMEM((Nb, Hp, Wp, C), sdt),
                        pltpu.VMEM((Nb, Hp, Wo, C), sdt)],
        compiler_params=pltpu.CompilerParams(
            dimension_semantics=("parallel",),
            vmem_limit_bytes=vmem_limit),
        cost_estimate=cost,
    )(x_cl)
    return jnp.transpose(out_cl, (0, 3, 1, 2))                  # back to NCHW


def upfirdn2d_pallas(x, taps_flip, pad):
    """upfirdn2d with up=1, down=1: separable FIR with the zero-pad fused in."""
    N, C, H, W = map(int, x.shape)
    kt = int(len(taps_flip))
    p0, p1 = int(pad[0]), int(pad[1])

    # Negative padding means cropping (rare path) -- done in the wrapper so the
    # kernels only ever see non-negative pads.
    if p0 < 0 or p1 < 0:
        c0, c1 = max(-p0, 0), max(-p1, 0)
        x = x[:, :, c0:H - c1, c0:W - c1]
        N, C, H, W = map(int, x.shape)
        p0, p1 = max(p0, 0), max(p1, 0)

    Hp, Wp = H + p0 + p1, W + p0 + p1
    Ho, Wo = Hp - kt + 1, Wp - kt + 1
    assert Ho > 0 and Wo > 0, (Ho, Wo)

    in_dt = x.dtype
    # bf16 inputs keep the scratch / band in bf16 (v6e/v7x lever); taps like
    # [1,3,3,1]/8 are exact in bf16.  Accumulation is always f32 on vregs.
    sdt = jnp.bfloat16 if in_dt == jnp.bfloat16 else jnp.float32
    taps = [float(t) for t in np.asarray(taps_flip, dtype=np.float64)]

    # Per-step VMEM budget from the actual device (v7x: 64 MiB/TC; v5e/v6e: 128).
    try:
        vmem_cap = int(pltpu.get_tpu_info().vmem_capacity_bytes)
    except Exception:                          # no TPU info -> conservative cap
        vmem_cap = 64 * 1024 * 1024
    budget = int(0.45 * vmem_cap)
    vmem_limit = int(min(0.70 * vmem_cap, 100 * 1024 * 1024))

    # Layout choice: channels-last (C on lanes) when it is lane-denser than
    # W-on-lanes AND one padded image fits the budget; otherwise plane layout.
    per_image_cl = (
        2 * _vmem_bytes((1, H, W, C), in_dt)
        + 2 * _vmem_bytes((1, Ho, Wo, C), in_dt)
        + _vmem_bytes((1, Hp, Wp, C), sdt)
        + _vmem_bytes((1, Hp, Wo, C), sdt)
        + 2 * _vmem_bytes((1, Hp, Wo, C), jnp.float32))
    if _lane_util(C) > _lane_util(Wo) and per_image_cl <= budget:
        return _upfirdn_channels_last(x, taps, p0, p1, sdt, budget, vmem_limit)
    return _upfirdn_planes(x, taps, p0, p1, sdt, budget, vmem_limit)


class UpFirDnSmooth:
    """JAX/Pallas port of VQFR UpFirDnSmooth (forward pass only)."""

    def __init__(self, resample_kernel, upsample_factor=1,
                 downsample_factor=1, kernel_size=1):
        self.upsample_factor = upsample_factor
        self.downsample_factor = downsample_factor

        k = np.asarray(resample_kernel, dtype=np.float64)
        if k.ndim != 1:
            # TODO(synk): non-separable 2D resample kernels (the module spec
            # passes a 1D magnitude list; VQFR always uses [1,3,3,1]).
            raise NotImplementedError("only 1D resample kernels are supported")
        k1d = k / k.sum()                                 # separable 1D factor
        self.kernel = make_resample_kernel(resample_kernel)      # 2D f32

        if upsample_factor > 1:
            self.kernel = self.kernel * (upsample_factor ** 2)
            k1d = k1d * upsample_factor
            pad_ = k.shape[0] - upsample_factor - (kernel_size - 1)
            self.pad = ((pad_ + 1) // 2 + upsample_factor - 1, pad_ // 2 + 1)
        elif downsample_factor > 1:
            pad_ = k.shape[0] - downsample_factor + (kernel_size - 1)
            self.pad = ((pad_ + 1) // 2, pad_ // 2)
        else:
            raise NotImplementedError

        # upfirdn2d correlates with the FLIPPED kernel -> flip the 1D taps.
        self._taps_flip = np.ascontiguousarray(k1d[::-1])

    def __call__(self, x):
        return upfirdn2d_pallas(x, self._taps_flip, self.pad)


def upfirdn2d_reference(x, kernel, pad):
    """Pure-JAX reference (depthwise conv with flipped kernel) for checking."""
    N, C, H, W = x.shape
    kh, kw = kernel.shape
    p0, p1 = pad
    xp = jnp.pad(x.astype(jnp.float32), ((0, 0), (0, 0), (p0, p1), (p0, p1)))
    w = jnp.broadcast_to(
        jnp.flip(kernel, (0, 1)).astype(jnp.float32)[None, None],
        (C, 1, kh, kw))
    out = jax.lax.conv_general_dilated(
        xp, w, window_strides=(1, 1), padding='VALID',
        dimension_numbers=('NCHW', 'OIHW', 'NCHW'),
        feature_group_count=C,
        precision=jax.lax.Precision.HIGHEST)
    return out.astype(x.dtype)


if __name__ == "__main__":
    # Typical StyleGAN "smooth before stride-2 conv" config:
    # resample_kernel=[1,3,3,1], downsample_factor=2, kernel_size=3
    mod = UpFirDnSmooth(resample_kernel=[1, 3, 3, 1],
                        upsample_factor=1, downsample_factor=2, kernel_size=3)
    kernel2d = jnp.asarray(mod.kernel)

    def check(x):
        out = jax.block_until_ready(mod(x))
        ref = jax.block_until_ready(upfirdn2d_reference(x, kernel2d, mod.pad))
        assert out.shape == ref.shape, (out.shape, ref.shape)
        np.testing.assert_allclose(np.asarray(out), np.asarray(ref),
                                   rtol=1e-4, atol=1e-4)

    key = jax.random.PRNGKey(0)
    # Small NCHW case (plane layout: W on lanes, horizontal FIR on the MXU).
    check(jax.random.normal(key, (2, 4, 16, 16), dtype=jnp.float32))
    # Production-style channel count (channels-last / lane-dense output path).
    check(jax.random.normal(key, (1, 128, 8, 8), dtype=jnp.float32))

    print("KERNEL_OK")
</pallas_src>

<mosaic_0001>
module attributes {stable_mosaic.version = 11 : i64} {
  func.func @kernel(%arg0: i32, %arg1: memref<4x16x16xf32, #tpu.memory_space<vmem>>, %arg2: memref<16x17xf32, #tpu.memory_space<vmem>>, %arg3: memref<4x17x17xf32, #tpu.memory_space<vmem>>, %arg4: memref<4x20x17xf32, #tpu.memory_space<vmem>>) attributes {dimension_semantics = [#tpu.dimension_semantics<parallel>], iteration_bounds = array<i64: 2>, scalar_prefetch = 0 : i64, scratch_operands = 1 : i64, tpu.core_type = #tpu.core_type<tc>, window_params = [{transform_indices = @transform_0, window_bounds = array<i64: 4, 16, 16>}, {pipeline_mode = #tpu.pipeline_mode<synchronous>, transform_indices = @transform_1, window_bounds = array<i64: 16, 17>}, {transform_indices = @transform_2, window_bounds = array<i64: 4, 17, 17>}]} {
    %c0 = arith.constant 0 : index
    %c0_0 = arith.constant 0 : index
    %0 = vector.load %arg2[%c0, %c0_0] : memref<16x17xf32, #tpu.memory_space<vmem>>, vector<16x17xf32>
    %1 = vector.shape_cast %0 : vector<16x17xf32> to vector<1x16x17xf32>
    %2 = vector.broadcast %1 : vector<1x16x17xf32> to vector<4x16x17xf32>
    %c0_1 = arith.constant 0 : index
    %c0_2 = arith.constant 0 : index
    %c0_3 = arith.constant 0 : index
    %3 = vector.load %arg1[%c0_1, %c0_2, %c0_3] : memref<4x16x16xf32, #tpu.memory_space<vmem>>, vector<4x16x16xf32>
    "tpu.trace_start"() <{level = 10 : i32, message = "chw,cwo->cho"}> : () -> ()
    %cst = arith.constant dense<0.000000e+00> : vector<4x16x17xf32>
    %4 = tpu.matmul %3, %2, %cst {dimension_numbers = #tpu.dot_dimension_numbers<[2], [1], [1], [2], [0, 0, 0, 1, 1, 2], [0], [0]>, precision = #tpu.contract_precision<fp32>} : vector<4x16x16xf32>, vector<4x16x17xf32>, vector<4x16x17xf32> -> vector<4x16x17xf32>
    %cst_4 = arith.constant 0.000000e+00 : f32
    "tpu.trace_stop"() : () -> ()
    %5 = vector.broadcast %cst_4 : f32 to vector<4x2x17xf32>
    %c0_5 = arith.constant 0 : index
    %c0_6 = arith.constant 0 : index
    %c0_7 = arith.constant 0 : index
    %6 = vector.load %arg4[%c0_5, %c0_6, %c0_7] : memref<4x20x17xf32, #tpu.memory_space<vmem>>, vector<4x2x17xf32>
    tpu.vector_store %arg4[%c0_5, %c0_6, %c0_7], %5 {strides = array<i32>} : memref<4x20x17xf32, #tpu.memory_space<vmem>>, vector<4x2x17xf32>,
    %cst_8 = arith.constant 0.000000e+00 : f32
    %7 = vector.broadcast %cst_8 : f32 to vector<4x2x17xf32>
    %c0_9 = arith.constant 0 : index
    %c18 = arith.constant 18 : index
    %c0_10 = arith.constant 0 : index
    %8 = vector.load %arg4[%c0_9, %c18, %c0_10] : memref<4x20x17xf32, #tpu.memory_space<vmem>>, vector<4x2x17xf32>
    tpu.vector_store %arg4[%c0_9, %c18, %c0_10], %7 {strides = array<i32>} : memref<4x20x17xf32, #tpu.memory_space<vmem>>, vector<4x2x17xf32>,
    %c0_11 = arith.constant 0 : index
    %c2 = arith.constant 2 : index
    %c0_12 = arith.constant 0 : index
    %9 = vector.load %arg4[%c0_11, %c2, %c0_12] : memref<4x20x17xf32, #tpu.memory_space<vmem>>, vector<4x16x17xf32>
    tpu.vector_store %arg4[%c0_11, %c2, %c0_12], %4 {strides = array<i32>} : memref<4x20x17xf32, #tpu.memory_space<vmem>>, vector<4x16x17xf32>,
    %c0_13 = arith.constant 0 : index
    %c0_14 = arith.constant 0 : index
    %c0_15 = arith.constant 0 : index
    %10 = vector.load %arg4[%c0_13, %c0_14, %c0_15] : memref<4x20x17xf32, #tpu.memory_space<vmem>>, vector<4x17x17xf32>
    %cst_16 = arith.constant 1.250000e-01 : f32
    %11 = vector.broadcast %cst_16 : f32 to vector<4x17x17xf32>
    %12 = arith.mulf %11, %10 : vector<4x17x17xf32>
    %c0_17 = arith.constant 0 : index
    %c1 = arith.constant 1 : index
    %c0_18 = arith.constant 0 : index
    %13 = vector.load %arg4[%c0_17, %c1, %c0_18] : memref<4x20x17xf32, #tpu.memory_space<vmem>>, vector<4x17x17xf32>
    %cst_19 = arith.constant 3.750000e-01 : f32
    %14 = vector.broadcast %cst_19 : f32 to vector<4x17x17xf32>
    %15 = arith.mulf %14, %13 : vector<4x17x17xf32>
    %16 = arith.addf %12, %15 : vector<4x17x17xf32>
    %c0_20 = arith.constant 0 : index
    %c2_21 = arith.constant 2 : index
    %c0_22 = arith.constant 0 : index
    %17 = vector.load %arg4[%c0_20, %c2_21, %c0_22] : memref<4x20x17xf32, #tpu.memory_space<vmem>>, vector<4x17x17xf32>
    %cst_23 = arith.constant 3.750000e-01 : f32
    %18 = vector.broadcast %cst_23 : f32 to vector<4x17x17xf32>
    %19 = arith.mulf %18, %17 : vector<4x17x17xf32>
    %20 = arith.addf %16, %19 : vector<4x17x17xf32>
    %c0_24 = arith.constant 0 : index
    %c3 = arith.constant 3 : index
    %c0_25 = arith.constant 0 : index
    %21 = vector.load %arg4[%c0_24, %c3, %c0_25] : memref<4x20x17xf32, #tpu.memory_space<vmem>>, vector<4x17x17xf32>
    %cst_26 = arith.constant 1.250000e-01 : f32
    %22 = vector.broadcast %cst_26 : f32 to vector<4x17x17xf32>
    %23 = arith.mulf %22, %21 : vector<4x17x17xf32>
    %24 = arith.addf %20, %23 : vector<4x17x17xf32>
    %c0_27 = arith.constant 0 : index
    %c0_28 = arith.constant 0 : index
    %c0_29 = arith.constant 0 : index
    %25 = vector.load %arg3[%c0_27, %c0_28, %c0_29] : memref<4x17x17xf32, #tpu.memory_space<vmem>>, vector<4x17x17xf32>
    tpu.vector_store %arg3[%c0_27, %c0_28, %c0_29], %24 {strides = array<i32>} : memref<4x17x17xf32, #tpu.memory_space<vmem>>, vector<4x17x17xf32>,
    return
  }
  func.func @transform_0(%arg0: i32) -> (i32, i32, i32) {
    %c0_i32 = arith.constant 0 : i32
    %c0_i32_0 = arith.constant 0 : i32
    %c0_i32_1 = arith.constant 0 : i32
    return %arg0, %c0_i32, %c0_i32_0 : i32, i32, i32
  }
  func.func @transform_1(%arg0: i32) -> (i32, i32) {
    %c0_i32 = arith.constant 0 : i32
    %c0_i32_0 = arith.constant 0 : i32
    %c0_i32_1 = arith.constant 0 : i32
    return %c0_i32, %c0_i32_0 : i32, i32
  }
  func.func @transform_2(%arg0: i32) -> (i32, i32, i32) {
    %c0_i32 = arith.constant 0 : i32
    %c0_i32_0 = arith.constant 0 : i32
    %c0_i32_1 = arith.constant 0 : i32
    return %arg0, %c0_i32, %c0_i32_0 : i32, i32, i32
  }
}

</mosaic_0001>

<llo_original>
// kernel: tpu_custom_call.1
$region0: #{tpu_custom_call.1}
  #allocation0 [shape = 'u32[]', space=smem, size = 0x4, offset = 0x4, fixed_abs, tag = 'smem constant byte address 0x4 - core index']
  #allocation1 [shape = 'u32[144,128]{1,0:T(1,128)}', space=vmem, size = 0x12000, scoped, tag = 'internal scratch']
  #allocation2 [shape = 'f32[4,20,17]{2,1,0:T(8,128)}', space=vmem, size = 0xc000, scoped, tag = 'scratch operand']
  %s0 = inlined_call_operand.hbm [shape: f32[8,16,16], index: 0, kind: input, shape index: {}]
  %s1 = inlined_call_operand.hbm [shape: f32[16,17], index: 1, kind: input, shape index: {}]
  %s2 = inlined_call_operand.vmem [shape: f32[8,17,17], index: 2, kind: output, shape index: {}]
  %s3 = sld [smem:[#allocation0]]
  $region49: #{tpu_custom_call.1} parent=0
    _
  %s5 = ssub.s32 1, %s3
  %s6 = scalar_select 0, %s5, %s3
  $region1: #{tpu_custom_call.1} parent=0
    #allocation3 [shape = 'u8[65536]{0}', space=vmem, size = 0x10000, scoped, tag = 'input window, operand 0']
    #allocation4 [shape = 's32[2]{0}', space=sflag, size = 0x8, scoped, tag = 'scoped memory for tpu_custom_call.1']
    #allocation5 [shape = 'u8[8192]{0}', space=vmem, size = 0x2000, scoped, tag = 'input window, operand 1, single buffered']
    #allocation6 [shape = 's32[1]{0}', space=sflag, size = 0x4, scoped, tag = 'scoped memory for tpu_custom_call.1']
    %7 = vsyncpa [#allocation4], 0
    %s8 = scalar_lea.sflag [#allocation4], 1
    %9 = vsyncpa %s8, 0
    %10 = vsyncpa [#allocation6], 0
    loop: start=0, step=1, limit=4
    $region2: #{tpu_custom_call.1} parent=1 // loop_pre_header
      _
    $region3: #{tpu_custom_call.1} parent=1 // loop_header
      %s12 = sphi 0, %s16
      %p13 = scmp.ge.s32.totalorder %s12, 4
      %s22 = sphi 0, %s24
      %s25 = sphi 0, %s22
      %s26 = sphi 0, %s25
      %s42 = sphi 0, %s26
      %s46 = sphi 0, %s46
      %s48 = sphi 0, %s46
      %s49 = sphi 0, %s48
      %s63 = sphi 0, %s49
      %s69 = sphi 0, %s71
      %s72 = sphi 0, %s69
      %s73 = sphi 0, %s72
      %s89 = sphi 0, %s73
    $region4: #{tpu_custom_call.1} parent=1 // loop_header_branch
      %15 = sbr.rel (%p13) target = $region8
    $region5: #{tpu_custom_call.1} parent=1 // loop_body
      %s17 = ssub.s32 %s12, 1
      %s18 = ssub.s32 %s12, 2
      %s19 = sadd.s32 %s12, 1
      %s20 = ssub.s32 %s12, %s19
      %p21 = scmp.eq.s32.totalorder %s20, 0
      %s23 = sadd.s32 %s22, 1
      %s24 = scalar_select %p21, %s22, %s23
      %p27 = pneg %p21
      %p28 = scmp.eq.s32.totalorder %s12, 1
      %p29 = por %p27, %p28
      %p30 = scmp.ne.s32.totalorder %s22, %s25
      %p31 = scmp.eq.s32.totalorder %s12, 0
      %p32 = por %p30, %p31
      %p33 = scmp.ne.s32.totalorder %s22, %s25
      %p34 = scmp.eq.s32.totalorder %s17, 1
      %p35 = por %p33, %p34
      %p36 = scmp.ne.s32.totalorder %s25, %s26
      %p37 = scmp.eq.s32.totalorder %s17, 0
      %p38 = por %p36, %p37
      %p39 = scmp.ne.s32.totalorder %s25, %s26
      %p40 = scmp.eq.s32.totalorder %s18, 1
      %p41 = por %p39, %p40
      %p43 = scmp.ne.s32.totalorder %s26, %s42
      %p44 = scmp.eq.s32.totalorder %s18, 0
      %p45 = por %p43, %p44
      %s47 = sadd.s32 %s46, 1
      %p50 = scmp.eq.s32.totalorder %s12, 1
      %p51 = scmp.ne.s32.totalorder %s46, %s48
      %p52 = scmp.eq.s32.totalorder %s12, 0
      %p53 = por %p51, %p52
      %p54 = scmp.ne.s32.totalorder %s46, %s48
      %p55 = scmp.eq.s32.totalorder %s17, 1
      %p56 = por %p54, %p55
      %p57 = scmp.ne.s32.totalorder %s48, %s49
      %p58 = scmp.eq.s32.totalorder %s17, 0
      %p59 = por %p57, %p58
      %p60 = scmp.ne.s32.totalorder %s48, %s49
      %p61 = scmp.eq.s32.totalorder %s18, 1
      %p62 = por %p60, %p61
      %p64 = scmp.ne.s32.totalorder %s49, %s63
      %p65 = scmp.eq.s32.totalorder %s18, 0
      %p66 = por %p64, %p65
      %s67 = ssub.s32 %s12, %s19
      %p68 = scmp.eq.s32.totalorder %s67, 0
      %s70 = sadd.s32 %s69, 1
      %s71 = scalar_select %p68, %s69, %s70
      %p74 = pneg %p68
      %p75 = scmp.eq.s32.totalorder %s12, 1
      %p76 = por %p74, %p75
      %p77 = scmp.ne.s32.totalorder %s69, %s72
      %p78 = scmp.eq.s32.totalorder %s12, 0
      %p79 = por %p77, %p78
      %p80 = scmp.ne.s32.totalorder %s69, %s72
      %p81 = scmp.eq.s32.totalorder %s17, 1
      %p82 = por %p80, %p81
      %p83 = scmp.ne.s32.totalorder %s72, %s73
      %p84 = scmp.eq.s32.totalorder %s17, 0
      %p85 = por %p83, %p84
      %p86 = scmp.ne.s32.totalorder %s72, %s73
      %p87 = scmp.eq.s32.totalorder %s18, 1
      %p88 = por %p86, %p87
      %p90 = scmp.ne.s32.totalorder %s73, %s89
      %p91 = scmp.eq.s32.totalorder %s18, 0
      %p92 = por %p90, %p91
      %p93 = scmp.le.s32.totalorder 1, %s12
      %p94 = scmp.lt.s32.totalorder %s12, 3
      %p95 = pnand %p93, %p94
      %p96 = pneg %p95
      // Predicated region
      $region9: #{tpu_custom_call.1} parent=5 // pred_check
        _
      $region10: #{tpu_custom_call.1} parent=5 // pred_check_branch
        %98 = sbr.rel (%p95) target = $region12
      $region11: #{tpu_custom_call.1} parent=5 // pred_region
        %s99 = ssub.s32 %s12, 1
        // Predicated region
        $region13: #{tpu_custom_call.1} parent=11 // pred_check
          %p100 = pneg %p59
        $region14: #{tpu_custom_call.1} parent=11 // pred_check_branch
          %102 = sbr.rel (%p100) target = $region16
        $region15: #{tpu_custom_call.1} parent=11 // pred_region
          %s104 = ssub.s32 256, 256
          %105 = vsyncadd [#allocation6], %s104
          %s106 = sshll.u32 [#allocation5], 4
          %s107 = int_to_ptr.vmem [resolvable:$true] %s106
          %112 = dma.hbm_to_vmem [thread:$0]  %s1, 256, %s107, [#allocation6], 128, 128, 8
        $region16: #{tpu_custom_call.1} parent=11 // pred_fallthru
          _
      $region12: #{tpu_custom_call.1} parent=5 // pred_fallthru
        _
      %p113 = scmp.lt.s32.totalorder %s12, 2
      // Predicated region
      $region17: #{tpu_custom_call.1} parent=5 // pred_check
        %p114 = pneg %p113
      $region18: #{tpu_custom_call.1} parent=5 // pred_check_branch
        %116 = sbr.rel (%p114) target = $region20
      $region19: #{tpu_custom_call.1} parent=5 // pred_region
        // Predicated region
        $region21: #{tpu_custom_call.1} parent=19 // pred_check
          %p117 = pneg %p32
        $region22: #{tpu_custom_call.1} parent=19 // pred_check_branch
          %119 = sbr.rel (%p117) target = $region24
        $region23: #{tpu_custom_call.1} parent=19 // pred_region
          %s120 = sand.u32 %s22, 1
          %s121 = scalar_lea.sflag [#allocation4], %s120
          %s122 = sand.u32 %s22, 1
          %s123 = smul.addr %s122, 64
          %s124 = scalar_lea.vmem [#allocation3], %s123
          %s125 = smul.u32 4, %s12
          %s127 = ssub.s32 1024, 1024
          %128 = vsyncadd %s121, %s127
          %s129 = smul.addr %s125, 2
          %s130 = smul.addr %s129, 128
          %s131 = scalar_lea.hbm %s0, %s130
          %s132 = sshll.u32 %s124, 4
          %s133 = int_to_ptr.vmem [resolvable:$true] %s132
          %138 = dma.hbm_to_vmem [thread:$0]  %s131, 1024, %s133, %s121, 128, 128, 8
        $region24: #{tpu_custom_call.1} parent=19 // pred_fallthru
          _
      $region20: #{tpu_custom_call.1} parent=5 // pred_fallthru
        _
      %p139 = scmp.le.s32.totalorder 1, %s12
      %p140 = scmp.lt.s32.totalorder %s12, 3
      %p141 = pnand %p139, %p140
      %p142 = pneg %p141
      // Predicated region
      $region25: #{tpu_custom_call.1} parent=5 // pred_check
        _
      $region26: #{tpu_custom_call.1} parent=5 // pred_check_branch
        %144 = sbr.rel (%p141) target = $region28
      $region27: #{tpu_custom_call.1} parent=5 // pred_region
        %s145 = ssub.s32 %s12, 1
        %s146 = sand.u32 %s25, 1
        %s147 = scalar_lea.sflag [#allocation4], %s146
        %s148 = sand.u32 %s25, 1
        %s149 = smul.addr %s148, 64
        %s150 = scalar_lea.vmem [#allocation3], %s149
        // Predicated region
        $region29: #{tpu_custom_call.1} parent=27 // pred_check
          %p151 = pneg %p38
        $region30: #{tpu_custom_call.1} parent=27 // pred_check_branch
          %153 = sbr.rel (%p151) target = $region32
        $region31: #{tpu_custom_call.1} parent=27 // pred_region
          %154 = dma.done %s147, 1024
        $region32: #{tpu_custom_call.1} parent=27 // pred_fallthru
          _
        // Predicated region
        $region33: #{tpu_custom_call.1} parent=27 // pred_check
          %p155 = pneg %p59
        $region34: #{tpu_custom_call.1} parent=27 // pred_check_branch
          %157 = sbr.rel (%p155) target = $region36
        $region35: #{tpu_custom_call.1} parent=27 // pred_region
          %158 = dma.done [#allocation6], 256
        $region36: #{tpu_custom_call.1} parent=27 // pred_fallthru
          _
        %s159 = sand.u32 %s25, 1
        %s160 = scalar_lea.sflag [#allocation4], %s159
        %s161 = sand.u32 %s25, 1
        %s162 = smul.addr %s161, 64
        %s163 = scalar_lea.vmem [#allocation3], %s162
        %p164 = pneg %p38
        %p165 = pneg %p35
        %p166 = pneg %p59
        %p167 = pneg %p56
        %p168 = pneg %p85
        %p169 = pneg %p82
        %s170 = smul.u32 4, %s17
        %p171 = scmp.lt.s32.totalorder %s170, 7
        %s172 = scalar_select %p171, %s170, 7
        %s173 = smul.addr %s172, 3
        %s174 = smul.addr %s173, 8
        %s175 = scalar_lea.vmem %s2, %s174
        %s176 = smul.u32 4, %s17
        %s177 = smul.u32 4, %s17
        %p178 = scmp.lt.s32.totalorder %s177, 7
        %s179 = scalar_select %p178, %s177, 7
        %s180 = smul.addr %s179, 3
        %s181 = smul.addr %s180, 8
        %s182 = scalar_lea.vmem %s2, %s181
        %s183 = smul.u32 4, %s17
        %v184 = vld [vmem:[#allocation5] sm:$0xff]
        %v185 = vld [vmem:[#allocation5 + $0x8] sm:$0xff]
        %v186 = vld [vmem:[%s150] sm:$0xff]
        %v187 = vld [vmem:[%s150 + $0x8] sm:$0xff]
        %v188 = vld [vmem:[%s150 + $0x10] sm:$0xff]
        %v189 = vld [vmem:[%s150 + $0x18] sm:$0xff]
        %v190 = vld [vmem:[%s150 + $0x20] sm:$0xff]
        %v191 = vld [vmem:[%s150 + $0x28] sm:$0xff]
        %v192 = vld [vmem:[%s150 + $0x30] sm:$0xff]
        %v193 = vld [vmem:[%s150 + $0x38] sm:$0xff]
        %vm194 = vcmask 130048
        %v196 = vsel %vm194, %v186, 0
        %v199 = vsel %vm194, %v187, 0
        %201 = vmatprep.subr.mxu0 0.0
        %v202 = vand.u32 %v184, 4294901760
        %203 = vmatpush1.msra.mxu0 %v202
        %204 = vmatprep.subr.mxu0 0.0
        %v205 = vand.u32 %v185, 4294901760
        %206 = vmatpush1.msra.mxu0 %v205
        %207 = vmatprep.subr.mxu0 0.0
        %208 = vmatpush1.msra.mxu0 0.0
        %209 = vmatprep.subr.mxu0 0.0
        %210 = vmatpush1.msra.mxu0 0.0
        %211 = vmatprep.subr.mxu0 0.0
        %212 = vmatpush1.msra.mxu0 0.0
        %213 = vmatprep.subr.mxu0 0.0
        %214 = vmatpush1.msra.mxu0 0.0
        %215 = vmatprep.subr.mxu0 0.0
        %216 = vmatpush1.msra.mxu0 0.0
        %217 = vmatprep.subr.mxu0 0.0
        %218 = vmatpush1.msra.mxu0 0.0
        %219 = vmatprep.subr.mxu0 0.0
        %220 = vmatpush1.msra.mxu0 0.0
        %221 = vmatprep.subr.mxu0 0.0
        %222 = vmatpush1.msra.mxu0 0.0
        %223 = vmatprep.subr.mxu0 0.0
        %224 = vmatpush1.msra.mxu0 0.0
        %225 = vmatprep.subr.mxu0 0.0
        %226 = vmatpush1.msra.mxu0 0.0
        %227 = vmatprep.subr.mxu0 0.0
        %228 = vmatpush1.msra.mxu0 0.0
        %229 = vmatprep.subr.mxu0 0.0
        %230 = vmatpush1.msra.mxu0 0.0
        %231 = vmatprep.subr.mxu0 0.0
        %232 = vmatpush1.msra.mxu0 0.0
        %233 = vmatprep.subr.mxu0 0.0
        %234 = vmatpush1.msra.mxu0 0.0
        %235 = vmatprep.subr.mxu0 0.0
        %236 = vmatpush1.msra.mxu0 0.0
        %237 = vmatprep.subr.mxu0 0.0
        %238 = vmatpush1.msra.mxu0 0.0
        %239 = vmatprep.subr.mxu0 0.0
        %240 = vmatpush1.msra.mxu0 0.0
        %241 = vmatprep.subr.mxu0 0.0
        %242 = vmatpush1.msra.mxu0 0.0
        %243 = vmatprep.subr.mxu0 0.0
        %244 = vmatpush1.msra.mxu0 0.0
        %245 = vmatprep.subr.mxu0 0.0
        %246 = vmatpush1.msra.mxu0 0.0
        %247 = vmatprep.subr.mxu0 0.0
        %248 = vmatpush1.msra.mxu0 0.0
        %249 = vmatprep.subr.mxu0 0.0
        %250 = vmatpush1.msra.mxu0 0.0
        %251 = vmatprep.subr.mxu0 0.0
        %252 = vmatpush1.msra.mxu0 0.0
        %253 = vmatprep.subr.mxu0 0.0
        %254 = vmatpush1.msra.mxu0 0.0
        %255 = vmatprep.subr.mxu0 0.0
        %256 = vmatpush1.msra.mxu0 0.0
        %257 = vmatprep.subr.mxu0 0.0
        %258 = vmatpush1.msra.mxu0 0.0
        %259 = vmatprep.subr.mxu0 0.0
        %260 = vmatpush1.msra.mxu0 0.0
        %261 = vmatprep.subr.mxu0 0.0
        %262 = vmatpush1.msra.mxu0 0.0
        %263 = vmatprep.subr.mxu0 0.0
        %264 = vmatpush1.msra.mxu0 0.0
        %265 = vmatprep.subr.mxu0 0.0
        %266 = vmatpush1.msra.mxu0 0.0
        %267 = vmatprep.mubr.f32.mxu0 0.0
        %v268 = vand.u32 %v196, 4294901760
        %v269 = vsub.f32 %v196, %v268
        %v270 = vand.u32 %v269, 4294901760
        %v271 = vsub.f32 %v269, %v270
        %v272 = vand.u32 %v271, 4294901760
        %273 = vmatmul.mubr.f32.gmra.mrb[0].mxu0 %v272
        %v274 = vpop.f32.mrb[0].mxu0
        %v275 = vadd.f32 0.0, %v274
        %v276 = vpop.f32.mrb[0].mxu0
        %277 = vmatprep.mubr.f32.mxu0 0.0
        %v278 = vand.u32 %v199, 4294901760
        %v279 = vsub.f32 %v199, %v278
        %v280 = vand.u32 %v279, 4294901760
        %v281 = vsub.f32 %v279, %v280
        %v282 = vand.u32 %v281, 4294901760
        %283 = vmatmul.mubr.f32.gmra.mrb[0].mxu0 %v282
        %v284 = vpop.f32.mrb[0].mxu0
        %v285 = vadd.f32 0.0, %v284
        %v286 = vpop.f32.mrb[0].mxu0
        %287 = vdwg.mxu0
        %288 = vmatprep.subr.mxu0 0.0
        %v289 = vand.u32 %v184, 4294901760
        %v290 = vsub.f32 %v184, %v289
        %v291 = vand.u32 %v290, 4294901760
        %v292 = vsub.f32 %v290, %v291
        %v293 = vand.u32 %v292, 4294901760
        %294 = vmatpush1.msra.mxu0 %v293
        %295 = vmatprep.subr.mxu0 0.0
        %v296 = vand.u32 %v185, 4294901760
        %v297 = vsub.f32 %v185, %v296
        %v298 = vand.u32 %v297, 4294901760
        %v299 = vsub.f32 %v297, %v298
        %v300 = vand.u32 %v299, 4294901760
        %301 = vmatpush1.msra.mxu0 %v300
        %302 = vmatprep.subr.mxu0 0.0
        %303 = vmatpush1.msra.mxu0 0.0
        %304 = vmatprep.subr.mxu0 0.0
        %305 = vmatpush1.msra.mxu0 0.0
        %306 = vmatprep.subr.mxu0 0.0
        %307 = vmatpush1.msra.mxu0 0.0
        %308 = vmatprep.subr.mxu0 0.0
        %309 = vmatpush1.msra.mxu0 0.0
        %310 = vmatprep.subr.mxu0 0.0
        %311 = vmatpush1.msra.mxu0 0.0
        %312 = vmatprep.subr.mxu0 0.0
        %313 = vmatpush1.msra.mxu0 0.0
        %314 = vmatprep.subr.mxu0 0.0
        %315 = vmatpush1.msra.mxu0 0.0
        %316 = vmatprep.subr.mxu0 0.0
        %317 = vmatpush1.msra.mxu0 0.0
        %318 = vmatprep.subr.mxu0 0.0
        %319 = vmatpush1.msra.mxu0 0.0
        %320 = vmatprep.subr.mxu0 0.0
        %321 = vmatpush1.msra.mxu0 0.0
        %322 = vmatprep.subr.mxu0 0.0
        %323 = vmatpush1.msra.mxu0 0.0
        %324 = vmatprep.subr.mxu0 0.0
        %325 = vmatpush1.msra.mxu0 0.0
        %326 = vmatprep.subr.mxu0 0.0
        %327 = vmatpush1.msra.mxu0 0.0
        %328 = vmatprep.subr.mxu0 0.0
        %329 = vmatpush1.msra.mxu0 0.0
        %330 = vmatprep.subr.mxu0 0.0
        %331 = vmatpush1.msra.mxu0 0.0
        %332 = vmatprep.subr.mxu0 0.0
        %333 = vmatpush1.msra.mxu0 0.0
        %334 = vmatprep.subr.mxu0 0.0
        %335 = vmatpush1.msra.mxu0 0.0
        %336 = vmatprep.subr.mxu0 0.0
        %337 = vmatpush1.msra.mxu0 0.0
        %338 = vmatprep.subr.mxu0 0.0
        %339 = vmatpush1.msra.mxu0 0.0
        %340 = vmatprep.subr.mxu0 0.0
        %341 = vmatpush1.msra.mxu0 0.0
        %342 = vmatprep.subr.mxu0 0.0
        %343 = vmatpush1.msra.mxu0 0.0
        %344 = vmatprep.subr.mxu0 0.0
        %345 = vmatpush1.msra.mxu0 0.0
        %346 = vmatprep.subr.mxu0 0.0
        %347 = vmatpush1.msra.mxu0 0.0
        %348 = vmatprep.subr.mxu0 0.0
        %349 = vmatpush1.msra.mxu0 0.0
        %350 = vmatprep.subr.mxu0 0.0
        %351 = vmatpush1.msra.mxu0 0.0
        %352 = vmatprep.subr.mxu0 0.0
        %353 = vmatpush1.msra.mxu0 0.0
        %354 = vmatprep.subr.mxu0 0.0
        %355 = vmatpush1.msra.mxu0 0.0
        %356 = vmatprep.subr.mxu0 0.0
        %357 = vmatpush1.msra.mxu0 0.0
        %358 = vmatprep.subr.mxu0 0.0
        %359 = vmatpush1.msra.mxu0 0.0
        %360 = vmatprep.subr.mxu0 0.0
        %361 = vmatpush1.msra.mxu0 0.0
        %362 = vmatprep.mubr.f32.mxu0 0.0
        %v363 = vand.u32 %v196, 4294901760
        %364 = vmatmul.mubr.f32.gmra.mrb[0].mxu0 %v363
        %v365 = vpop.f32.mrb[0].mxu0
        %v366 = vadd.f32 %v275, %v365
        %v367 = vpop.f32.mrb[0].mxu0
        %368 = vmatprep.mubr.f32.mxu0 0.0
        %v369 = vand.u32 %v199, 4294901760
        %370 = vmatmul.mubr.f32.gmra.mrb[0].mxu0 %v369
        %v371 = vpop.f32.mrb[0].mxu0
        %v372 = vadd.f32 %v285, %v371
        %v373 = vpop.f32.mrb[0].mxu0
        %374 = vdwg.mxu0
        %375 = vmatprep.subr.mxu0 0.0
        %v376 = vand.u32 %v184, 4294901760
        %v377 = vsub.f32 %v184, %v376
        %378 = vmatpush1.msra.mxu0 %v377
        %379 = vmatprep.subr.mxu0 0.0
        %v380 = vand.u32 %v185, 4294901760
        %v381 = vsub.f32 %v185, %v380
        %382 = vmatpush1.msra.mxu0 %v381
        %383 = vmatprep.subr.mxu0 0.0
        %384 = vmatpush1.msra.mxu0 0.0
        %385 = vmatprep.subr.mxu0 0.0
        %386 = vmatpush1.msra.mxu0 0.0
        %387 = vmatprep.subr.mxu0 0.0
        %388 = vmatpush1.msra.mxu0 0.0
        %389 = vmatprep.subr.mxu0 0.0
        %390 = vmatpush1.msra.mxu0 0.0
        %391 = vmatprep.subr.mxu0 0.0
        %392 = vmatpush1.msra.mxu0 0.0
        %393 = vmatprep.subr.mxu0 0.0
        %394 = vmatpush1.msra.mxu0 0.0
        %395 = vmatprep.subr.mxu0 0.0
        %396 = vmatpush1.msra.mxu0 0.0
        %397 = vmatprep.subr.mxu0 0.0
        %398 = vmatpush1.msra.mxu0 0.0
        %399 = vmatprep.subr.mxu0 0.0
        %400 = vmatpush1.msra.mxu0 0.0
        %401 = vmatprep.subr.mxu0 0.0
        %402 = vmatpush1.msra.mxu0 0.0
        %403 = vmatprep.subr.mxu0 0.0
        %404 = vmatpush1.msra.mxu0 0.0
        %405 = vmatprep.subr.mxu0 0.0
        %406 = vmatpush1.msra.mxu0 0.0
        %407 = vmatprep.subr.mxu0 0.0
        %408 = vmatpush1.msra.mxu0 0.0
        %409 = vmatprep.subr.mxu0 0.0
        %410 = vmatpush1.msra.mxu0 0.0
        %411 = vmatprep.subr.mxu0 0.0
        %412 = vmatpush1.msra.mxu0 0.0
        %413 = vmatprep.subr.mxu0 0.0
        %414 = vmatpush1.msra.mxu0 0.0
        %415 = vmatprep.subr.mxu0 0.0
        %416 = vmatpush1.msra.mxu0 0.0
        %417 = vmatprep.subr.mxu0 0.0
        %418 = vmatpush1.msra.mxu0 0.0
        %419 = vmatprep.subr.mxu0 0.0
        %420 = vmatpush1.msra.mxu0 0.0
        %421 = vmatprep.subr.mxu0 0.0
        %422 = vmatpush1.msra.mxu0 0.0
        %423 = vmatprep.subr.mxu0 0.0
        %424 = vmatpush1.msra.mxu0 0.0
        %425 = vmatprep.subr.mxu0 0.0
        %426 = vmatpush1.msra.mxu0 0.0
        %427 = vmatprep.subr.mxu0 0.0
        %428 = vmatpush1.msra.mxu0 0.0
        %429 = vmatprep.subr.mxu0 0.0
        %430 = vmatpush1.msra.mxu0 0.0
        %431 = vmatprep.subr.mxu0 0.0
        %432 = vmatpush1.msra.mxu0 0.0
        %433 = vmatprep.subr.mxu0 0.0
        %434 = vmatpush1.msra.mxu0 0.0
        %435 = vmatprep.subr.mxu0 0.0
        %436 = vmatpush1.msra.mxu0 0.0
        %437 = vmatprep.subr.mxu0 0.0
        %438 = vmatpush1.msra.mxu0 0.0
        %439 = vmatprep.subr.mxu0 0.0
        %440 = vmatpush1.msra.mxu0 0.0
        %441 = vmatprep.subr.mxu0 0.0
        %442 = vmatpush1.msra.mxu0 0.0
        %443 = vmatprep.mubr.f32.mxu0 0.0
        %v444 = vand.u32 %v196, 4294901760
        %v445 = vsub.f32 %v196, %v444
        %446 = vmatmul.mubr.f32.gmra.mrb[0].mxu0 %v445
        %v447 = vpop.f32.mrb[0].mxu0
        %v448 = vadd.f32 %v366, %v447
        %v449 = vpop.f32.mrb[0].mxu0
        %450 = vmatprep.mubr.f32.mxu0 0.0
        %v451 = vand.u32 %v199, 4294901760
        %v452 = vsub.f32 %v199, %v451
        %453 = vmatmul.mubr.f32.gmra.mrb[0].mxu0 %v452
        %v454 = vpop.f32.mrb[0].mxu0
        %v455 = vadd.f32 %v372, %v454
        %v456 = vpop.f32.mrb[0].mxu0
        %457 = vdwg.mxu0
        %458 = vmatprep.subr.mxu0 0.0
        %v459 = vand.u32 %v184, 4294901760
        %460 = vmatpush1.msra.mxu0 %v459
        %461 = vmatprep.subr.mxu0 0.0
        %v462 = vand.u32 %v185, 4294901760
        %463 = vmatpush1.msra.mxu0 %v462
        %464 = vmatprep.subr.mxu0 0.0
        %465 = vmatpush1.msra.mxu0 0.0
        %466 = vmatprep.subr.mxu0 0.0
        %467 = vmatpush1.msra.mxu0 0.0
        %468 = vmatprep.subr.mxu0 0.0
        %469 = vmatpush1.msra.mxu0 0.0
        %470 = vmatprep.subr.mxu0 0.0
        %471 = vmatpush1.msra.mxu0 0.0
        %472 = vmatprep.subr.mxu0 0.0
        %473 = vmatpush1.msra.mxu0 0.0
        %474 = vmatprep.subr.mxu0 0.0
        %475 = vmatpush1.msra.mxu0 0.0
        %476 = vmatprep.subr.mxu0 0.0
        %477 = vmatpush1.msra.mxu0 0.0
        %478 = vmatprep.subr.mxu0 0.0
        %479 = vmatpush1.msra.mxu0 0.0
        %480 = vmatprep.subr.mxu0 0.0
        %481 = vmatpush1.msra.mxu0 0.0
        %482 = vmatprep.subr.mxu0 0.0
        %483 = vmatpush1.msra.mxu0 0.0
        %484 = vmatprep.subr.mxu0 0.0
        %485 = vmatpush1.msra.mxu0 0.0
        %486 = vmatprep.subr.mxu0 0.0
        %487 = vmatpush1.msra.mxu0 0.0
        %488 = vmatprep.subr.mxu0 0.0
        %489 = vmatpush1.msra.mxu0 0.0
        %490 = vmatprep.subr.mxu0 0.0
        %491 = vmatpush1.msra.mxu0 0.0
        %492 = vmatprep.subr.mxu0 0.0
        %493 = vmatpush1.msra.mxu0 0.0
        %494 = vmatprep.subr.mxu0 0.0
        %495 = vmatpush1.msra.mxu0 0.0
        %496 = vmatprep.subr.mxu0 0.0
        %497 = vmatpush1.msra.mxu0 0.0
        %498 = vmatprep.subr.mxu0 0.0
        %499 = vmatpush1.msra.mxu0 0.0
        %500 = vmatprep.subr.mxu0 0.0
        %501 = vmatpush1.msra.mxu0 0.0
        %502 = vmatprep.subr.mxu0 0.0
        %503 = vmatpush1.msra.mxu0 0.0
        %504 = vmatprep.subr.mxu0 0.0
        %505 = vmatpush1.msra.mxu0 0.0
        %506 = vmatprep.subr.mxu0 0.0
        %507 = vmatpush1.msra.mxu0 0.0
        %508 = vmatprep.subr.mxu0 0.0
        %509 = vmatpush1.msra.mxu0 0.0
        %510 = vmatprep.subr.mxu0 0.0
        %511 = vmatpush1.msra.mxu0 0.0
        %512 = vmatprep.subr.mxu0 0.0
        %513 = vmatpush1.msra.mxu0 0.0
        %514 = vmatprep.subr.mxu0 0.0
        %515 = vmatpush1.msra.mxu0 0.0
        %516 = vmatprep.subr.mxu0 0.0
        %517 = vmatpush1.msra.mxu0 0.0
        %518 = vmatprep.subr.mxu0 0.0
        %519 = vmatpush1.msra.mxu0 0.0
        %520 = vmatprep.subr.mxu0 0.0
        %521 = vmatpush1.msra.mxu0 0.0
        %522 = vmatprep.subr.mxu0 0.0
        %523 = vmatpush1.msra.mxu0 0.0
        %524 = vmatprep.mubr.f32.mxu0 0.0
        %v525 = vand.u32 %v196, 4294901760
        %v526 = vsub.f32 %v196, %v525
        %v527 = vand.u32 %v526, 4294901760
        %528 = vmatmul.mubr.f32.gmra.mrb[0].mxu0 %v527
        %v529 = vpop.f32.mrb[0].mxu0
        %v530 = vadd.f32 %v448, %v529
        %v531 = vpop.f32.mrb[0].mxu0
        %532 = vmatprep.mubr.f32.mxu0 0.0
        %v533 = vand.u32 %v199, 4294901760
        %v534 = vsub.f32 %v199, %v533
        %v535 = vand.u32 %v534, 4294901760
        %536 = vmatmul.mubr.f32.gmra.mrb[0].mxu0 %v535
        %v537 = vpop.f32.mrb[0].mxu0
        %v538 = vadd.f32 %v455, %v537
        %v539 = vpop.f32.mrb[0].mxu0
        %540 = vdwg.mxu0
        %541 = vmatprep.subr.mxu0 0.0
        %v542 = vand.u32 %v184, 4294901760
        %v543 = vsub.f32 %v184, %v542
        %v544 = vand.u32 %v543, 4294901760
        %545 = vmatpush1.msra.mxu0 %v544
        %546 = vmatprep.subr.mxu0 0.0
        %v547 = vand.u32 %v185, 4294901760
        %v548 = vsub.f32 %v185, %v547
        %v549 = vand.u32 %v548, 4294901760
        %550 = vmatpush1.msra.mxu0 %v549
        %551 = vmatprep.subr.mxu0 0.0
        %552 = vmatpush1.msra.mxu0 0.0
        %553 = vmatprep.subr.mxu0 0.0
        %554 = vmatpush1.msra.mxu0 0.0
        %555 = vmatprep.subr.mxu0 0.0
        %556 = vmatpush1.msra.mxu0 0.0
        %557 = vmatprep.subr.mxu0 0.0
        %558 = vmatpush1.msra.mxu0 0.0
        %559 = vmatprep.subr.mxu0 0.0
        %560 = vmatpush1.msra.mxu0 0.0
        %561 = vmatprep.subr.mxu0 0.0
        %562 = vmatpush1.msra.mxu0 0.0
        %563 = vmatprep.subr.mxu0 0.0
        %564 = vmatpush1.msra.mxu0 0.0
        %565 = vmatprep.subr.mxu0 0.0
        %566 = vmatpush1.msra.mxu0 0.0
        %567 = vmatprep.subr.mxu0 0.0
        %568 = vmatpush1.msra.mxu0 0.0
        %569 = vmatprep.subr.mxu0 0.0
        %570 = vmatpush1.msra.mxu0 0.0
        %571 = vmatprep.subr.mxu0 0.0
        %572 = vmatpush1.msra.mxu0 0.0
        %573 = vmatprep.subr.mxu0 0.0
        %574 = vmatpush1.msra.mxu0 0.0
        %575 = vmatprep.subr.mxu0 0.0
        %576 = vmatpush1.msra.mxu0 0.0
        %577 = vmatprep.subr.mxu0 0.0
        %578 = vmatpush1.msra.mxu0 0.0
        %579 = vmatprep.subr.mxu0 0.0
        %580 = vmatpush1.msra.mxu0 0.0
        %581 = vmatprep.subr.mxu0 0.0
        %582 = vmatpush1.msra.mxu0 0.0
        %583 = vmatprep.subr.mxu0 0.0
        %584 = vmatpush1.msra.mxu0 0.0
        %585 = vmatprep.subr.mxu0 0.0
        %586 = vmatpush1.msra.mxu0 0.0
        %587 = vmatprep.subr.mxu0 0.0
        %588 = vmatpush1.msra.mxu0 0.0
        %589 = vmatprep.subr.mxu0 0.0
        %590 = vmatpush1.msra.mxu0 0.0
        %591 = vmatprep.subr.mxu0 0.0
        %592 = vmatpush1.msra.mxu0 0.0
        %593 = vmatprep.subr.mxu0 0.0
        %594 = vmatpush1.msra.mxu0 0.0
        %595 = vmatprep.subr.mxu0 0.0
        %596 = vmatpush1.msra.mxu0 0.0
        %597 = vmatprep.subr.mxu0 0.0
        %598 = vmatpush1.msra.mxu0 0.0
        %599 = vmatprep.subr.mxu0 0.0
        %600 = vmatpush1.msra.mxu0 0.0
        %601 = vmatprep.subr.mxu0 0.0
        %602 = vmatpush1.msra.mxu0 0.0
        %603 = vmatprep.subr.mxu0 0.0
        %604 = vmatpush1.msra.mxu0 0.0
        %605 = vmatprep.subr.mxu0 0.0
        %606 = vmatpush1.msra.mxu0 0.0
        %607 = vmatprep.subr.mxu0 0.0
        %608 = vmatpush1.msra.mxu0 0.0
        %609 = vmatprep.subr.mxu0 0.0
        %610 = vmatpush1.msra.mxu0 0.0
        %611 = vmatprep.mubr.f32.mxu0 0.0
        %v612 = vand.u32 %v196, 4294901760
        %613 = vmatmul.mubr.f32.gmra.mrb[0].mxu0 %v612
        %v614 = vpop.f32.mrb[0].mxu0
        %v615 = vadd.f32 %v530, %v614
        %v616 = vpop.f32.mrb[0].mxu0
        %617 = vmatprep.mubr.f32.mxu0 0.0
        %v618 = vand.u32 %v199, 4294901760
        %619 = vmatmul.mubr.f32.gmra.mrb[0].mxu0 %v618
        %v620 = vpop.f32.mrb[0].mxu0
        %v621 = vadd.f32 %v538, %v620
        %v622 = vpop.f32.mrb[0].mxu0
        %623 = vdwg.mxu0
        %624 = vmatprep.subr.mxu0 0.0
        %v625 = vand.u32 %v184, 4294901760
        %626 = vmatpush1.msra.mxu0 %v625
        %627 = vmatprep.subr.mxu0 0.0
        %v628 = vand.u32 %v185, 4294901760
        %629 = vmatpush1.msra.mxu0 %v628
        %630 = vmatprep.subr.mxu0 0.0
        %631 = vmatpush1.msra.mxu0 0.0
        %632 = vmatprep.subr.mxu0 0.0
        %633 = vmatpush1.msra.mxu0 0.0
        %634 = vmatprep.subr.mxu0 0.0
        %635 = vmatpush1.msra.mxu0 0.0
        %636 = vmatprep.subr.mxu0 0.0
        %637 = vmatpush1.msra.mxu0 0.0
        %638 = vmatprep.subr.mxu0 0.0
        %639 = vmatpush1.msra.mxu0 0.0
        %640 = vmatprep.subr.mxu0 0.0
        %641 = vmatpush1.msra.mxu0 0.0
        %642 = vmatprep.subr.mxu0 0.0
        %643 = vmatpush1.msra.mxu0 0.0
        %644 = vmatprep.subr.mxu0 0.0
        %645 = vmatpush1.msra.mxu0 0.0
        %646 = vmatprep.subr.mxu0 0.0
        %647 = vmatpush1.msra.mxu0 0.0
        %648 = vmatprep.subr.mxu0 0.0
        %649 = vmatpush1.msra.mxu0 0.0
        %650 = vmatprep.subr.mxu0 0.0
        %651 = vmatpush1.msra.mxu0 0.0
        %652 = vmatprep.subr.mxu0 0.0
        %653 = vmatpush1.msra.mxu0 0.0
        %654 = vmatprep.subr.mxu0 0.0
        %655 = vmatpush1.msra.mxu0 0.0
        %656 = vmatprep.subr.mxu0 0.0
        %657 = vmatpush1.msra.mxu0 0.0
        %658 = vmatprep.subr.mxu0 0.0
        %659 = vmatpush1.msra.mxu0 0.0
        %660 = vmatprep.subr.mxu0 0.0
        %661 = vmatpush1.msra.mxu0 0.0
        %662 = vmatprep.subr.mxu0 0.0
        %663 = vmatpush1.msra.mxu0 0.0
        %664 = vmatprep.subr.mxu0 0.0
        %665 = vmatpush1.msra.mxu0 0.0
        %666 = vmatprep.subr.mxu0 0.0
        %667 = vmatpush1.msra.mxu0 0.0
        %668 = vmatprep.subr.mxu0 0.0
        %669 = vmatpush1.msra.mxu0 0.0
        %670 = vmatprep.subr.mxu0 0.0
        %671 = vmatpush1.msra.mxu0 0.0
        %672 = vmatprep.subr.mxu0 0.0
        %673 = vmatpush1.msra.mxu0 0.0
        %674 = vmatprep.subr.mxu0 0.0
        %675 = vmatpush1.msra.mxu0 0.0
        %676 = vmatprep.subr.mxu0 0.0
        %677 = vmatpush1.msra.mxu0 0.0
        %678 = vmatprep.subr.mxu0 0.0
        %679 = vmatpush1.msra.mxu0 0.0
        %680 = vmatprep.subr.mxu0 0.0
        %681 = vmatpush1.msra.mxu0 0.0
        %682 = vmatprep.subr.mxu0 0.0
        %683 = vmatpush1.msra.mxu0 0.0
        %684 = vmatprep.subr.mxu0 0.0
        %685 = vmatpush1.msra.mxu0 0.0
        %686 = vmatprep.subr.mxu0 0.0
        %687 = vmatpush1.msra.mxu0 0.0
        %688 = vmatprep.subr.mxu0 0.0
        %689 = vmatpush1.msra.mxu0 0.0
        %690 = vmatprep.mubr.f32.mxu0 0.0
        %v691 = vand.u32 %v196, 4294901760
        %692 = vmatmul.mubr.f32.gmra.mrb[0].mxu0 %v691
        %v693 = vpop.f32.mrb[0].mxu0
        %v694 = vadd.f32 %v615, %v693
        %v695 = vpop.f32.mrb[0].mxu0
        %696 = vmatprep.mubr.f32.mxu0 0.0
        %v697 = vand.u32 %v199, 4294901760
        %698 = vmatmul.mubr.f32.gmra.mrb[0].mxu0 %v697
        %v699 = vpop.f32.mrb[0].mxu0
        %v700 = vadd.f32 %v621, %v699
        %v701 = vpop.f32.mrb[0].mxu0
        %702 = vdwg.mxu0
        %v704 = vsel %vm194, %v188, 0
        %v707 = vsel %vm194, %v189, 0
        %709 = vmatprep.subr.mxu0 0.0
        %v710 = vand.u32 %v184, 4294901760
        %711 = vmatpush1.msra.mxu0 %v710
        %712 = vmatprep.subr.mxu0 0.0
        %v713 = vand.u32 %v185, 4294901760
        %714 = vmatpush1.msra.mxu0 %v713
        %715 = vmatprep.subr.mxu0 0.0
        %716 = vmatpush1.msra.mxu0 0.0
        %717 = vmatprep.subr.mxu0 0.0
        %718 = vmatpush1.msra.mxu0 0.0
        %719 = vmatprep.subr.mxu0 0.0
        %720 = vmatpush1.msra.mxu0 0.0
        %721 = vmatprep.subr.mxu0 0.0
        %722 = vmatpush1.msra.mxu0 0.0
        %723 = vmatprep.subr.mxu0 0.0
        %724 = vmatpush1.msra.mxu0 0.0
        %725 = vmatprep.subr.mxu0 0.0
        %726 = vmatpush1.msra.mxu0 0.0
        %727 = vmatprep.subr.mxu0 0.0
        %728 = vmatpush1.msra.mxu0 0.0
        %729 = vmatprep.subr.mxu0 0.0
        %730 = vmatpush1.msra.mxu0 0.0
        %731 = vmatprep.subr.mxu0 0.0
        %732 = vmatpush1.msra.mxu0 0.0
        %733 = vmatprep.subr.mxu0 0.0
        %734 = vmatpush1.msra.mxu0 0.0
        %735 = vmatprep.subr.mxu0 0.0
        %736 = vmatpush1.msra.mxu0 0.0
        %737 = vmatprep.subr.mxu0 0.0
        %738 = vmatpush1.msra.mxu0 0.0
        %739 = vmatprep.subr.mxu0 0.0
        %740 = vmatpush1.msra.mxu0 0.0
        %741 = vmatprep.subr.mxu0 0.0
        %742 = vmatpush1.msra.mxu0 0.0
        %743 = vmatprep.subr.mxu0 0.0
        %744 = vmatpush1.msra.mxu0 0.0
        %745 = vmatprep.subr.mxu0 0.0
        %746 = vmatpush1.msra.mxu0 0.0
        %747 = vmatprep.subr.mxu0 0.0
        %748 = vmatpush1.msra.mxu0 0.0
        %749 = vmatprep.subr.mxu0 0.0
        %750 = vmatpush1.msra.mxu0 0.0
        %751 = vmatprep.subr.mxu0 0.0
        %752 = vmatpush1.msra.mxu0 0.0
        %753 = vmatprep.subr.mxu0 0.0
        %754 = vmatpush1.msra.mxu0 0.0
        %755 = vmatprep.subr.mxu0 0.0
        %756 = vmatpush1.msra.mxu0 0.0
        %757 = vmatprep.subr.mxu0 0.0
        %758 = vmatpush1.msra.mxu0 0.0
        %759 = vmatprep.subr.mxu0 0.0
        %760 = vmatpush1.msra.mxu0 0.0
        %761 = vmatprep.subr.mxu0 0.0
        %762 = vmatpush1.msra.mxu0 0.0
        %763 = vmatprep.subr.mxu0 0.0
        %764 = vmatpush1.msra.mxu0 0.0
        %765 = vmatprep.subr.mxu0 0.0
        %766 = vmatpush1.msra.mxu0 0.0
        %767 = vmatprep.subr.mxu0 0.0
        %768 = vmatpush1.msra.mxu0 0.0
        %769 = vmatprep.subr.mxu0 0.0
        %770 = vmatpush1.msra.mxu0 0.0
        %771 = vmatprep.subr.mxu0 0.0
        %772 = vmatpush1.msra.mxu0 0.0
        %773 = vmatprep.subr.mxu0 0.0
        %774 = vmatpush1.msra.mxu0 0.0
        %775 = vmatprep.mubr.f32.mxu0 0.0
        %v776 = vand.u32 %v704, 4294901760
        %v777 = vsub.f32 %v704, %v776
        %v778 = vand.u32 %v777, 4294901760
        %v779 = vsub.f32 %v777, %v778
        %v780 = vand.u32 %v779, 4294901760
        %781 = vmatmul.mubr.f32.gmra.mrb[0].mxu0 %v780
        %v782 = vpop.f32.mrb[0].mxu0
        %v783 = vadd.f32 0.0, %v782
        %v784 = vpop.f32.mrb[0].mxu0
        %785 = vmatprep.mubr.f32.mxu0 0.0
        %v786 = vand.u32 %v707, 4294901760
        %v787 = vsub.f32 %v707, %v786
        %v788 = vand.u32 %v787, 4294901760
        %v789 = vsub.f32 %v787, %v788
        %v790 = vand.u32 %v789, 4294901760
        %791 = vmatmul.mubr.f32.gmra.mrb[0].mxu0 %v790
        %v792 = vpop.f32.mrb[0].mxu0
        %v793 = vadd.f32 0.0, %v792
        %v794 = vpop.f32.mrb[0].mxu0
        %795 = vdwg.mxu0
        %796 = vmatprep.subr.mxu0 0.0
        %v797 = vand.u32 %v184, 4294901760
        %v798 = vsub.f32 %v184, %v797
        %v799 = vand.u32 %v798, 4294901760
        %v800 = vsub.f32 %v798, %v799
        %v801 = vand.u32 %v800, 4294901760
        %802 = vmatpush1.msra.mxu0 %v801
        %803 = vmatprep.subr.mxu0 0.0
        %v804 = vand.u32 %v185, 4294901760
        %v805 = vsub.f32 %v185, %v804
        %v806 = vand.u32 %v805, 4294901760
        %v807 = vsub.f32 %v805, %v806
        %v808 = vand.u32 %v807, 4294901760
        %809 = vmatpush1.msra.mxu0 %v808
        %810 = vmatprep.subr.mxu0 0.0
        %811 = vmatpush1.msra.mxu0 0.0
        %812 = vmatprep.subr.mxu0 0.0
        %813 = vmatpush1.msra.mxu0 0.0
        %814 = vmatprep.subr.mxu0 0.0
        %815 = vmatpush1.msra.mxu0 0.0
        %816 = vmatprep.subr.mxu0 0.0
        %817 = vmatpush1.msra.mxu0 0.0
        %818 = vmatprep.subr.mxu0 0.0
        %819 = vmatpush1.msra.mxu0 0.0
        %820 = vmatprep.subr.mxu0 0.0
        %821 = vmatpush1.msra.mxu0 0.0
        %822 = vmatprep.subr.mxu0 0.0
        %823 = vmatpush1.msra.mxu0 0.0
        %824 = vmatprep.subr.mxu0 0.0
        %825 = vmatpush1.msra.mxu0 0.0
        %826 = vmatprep.subr.mxu0 0.0
        %827 = vmatpush1.msra.mxu0 0.0
        %828 = vmatprep.subr.mxu0 0.0
        %829 = vmatpush1.msra.mxu0 0.0
        %830 = vmatprep.subr.mxu0 0.0
        %831 = vmatpush1.msra.mxu0 0.0
        %832 = vmatprep.subr.mxu0 0.0
        %833 = vmatpush1.msra.mxu0 0.0
        %834 = vmatprep.subr.mxu0 0.0
        %835 = vmatpush1.msra.mxu0 0.0
        %836 = vmatprep.subr.mxu0 0.0
        %837 = vmatpush1.msra.mxu0 0.0
        %838 = vmatprep.subr.mxu0 0.0
        %839 = vmatpush1.msra.mxu0 0.0
        %840 = vmatprep.subr.mxu0 0.0
        %841 = vmatpush1.msra.mxu0 0.0
        %842 = vmatprep.subr.mxu0 0.0
        %843 = vmatpush1.msra.mxu0 0.0
        %844 = vmatprep.subr.mxu0 0.0
        %845 = vmatpush1.msra.mxu0 0.0
        %846 = vmatprep.subr.mxu0 0.0
        %847 = vmatpush1.msra.mxu0 0.0
        %848 = vmatprep.subr.mxu0 0.0
        %849 = vmatpush1.msra.mxu0 0.0
        %850 = vmatprep.subr.mxu0 0.0
        %851 = vmatpush1.msra.mxu0 0.0
        %852 = vmatprep.subr.mxu0 0.0
        %853 = vmatpush1.msra.mxu0 0.0
        %854 = vmatprep.subr.mxu0 0.0
        %855 = vmatpush1.msra.mxu0 0.0
        %856 = vmatprep.subr.mxu0 0.0
        %857 = vmatpush1.msra.mxu0 0.0
        %858 = vmatprep.subr.mxu0 0.0
        %859 = vmatpush1.msra.mxu0 0.0
        %860 = vmatprep.subr.mxu0 0.0
        %861 = vmatpush1.msra.mxu0 0.0
        %862 = vmatprep.subr.mxu0 0.0
        %863 = vmatpush1.msra.mxu0 0.0
        %864 = vmatprep.subr.mxu0 0.0
        %865 = vmatpush1.msra.mxu0 0.0
        %866 = vmatprep.subr.mxu0 0.0
        %867 = vmatpush1.msra.mxu0 0.0
        %868 = vmatprep.subr.mxu0 0.0
        %869 = vmatpush1.msra.mxu0 0.0
        %870 = vmatprep.mubr.f32.mxu0 0.0
        %v871 = vand.u32 %v704, 4294901760
        %872 = vmatmul.mubr.f32.gmra.mrb[0].mxu0 %v871
        %v873 = vpop.f32.mrb[0].mxu0
        %v874 = vadd.f32 %v783, %v873
        %v875 = vpop.f32.mrb[0].mxu0
        %876 = vmatprep.mubr.f32.mxu0 0.0
        %v877 = vand.u32 %v707, 4294901760
        %878 = vmatmul.mubr.f32.gmra.mrb[0].mxu0 %v877
        %v879 = vpop.f32.mrb[0].mxu0
        %v880 = vadd.f32 %v793, %v879
        %v881 = vpop.f32.mrb[0].mxu0
        %882 = vdwg.mxu0
        %883 = vmatprep.subr.mxu0 0.0
        %v884 = vand.u32 %v184, 4294901760
        %v885 = vsub.f32 %v184, %v884
        %886 = vmatpush1.msra.mxu0 %v885
        %887 = vmatprep.subr.mxu0 0.0
        %v888 = vand.u32 %v185, 4294901760
        %v889 = vsub.f32 %v185, %v888
        %890 = vmatpush1.msra.mxu0 %v889
        %891 = vmatprep.subr.mxu0 0.0
        %892 = vmatpush1.msra.mxu0 0.0
        %893 = vmatprep.subr.mxu0 0.0
        %894 = vmatpush1.msra.mxu0 0.0
        %895 = vmatprep.subr.mxu0 0.0
        %896 = vmatpush1.msra.mxu0 0.0
        %897 = vmatprep.subr.mxu0 0.0
        %898 = vmatpush1.msra.mxu0 0.0
        %899 = vmatprep.subr.mxu0 0.0
        %900 = vmatpush1.msra.mxu0 0.0
        %901 = vmatprep.subr.mxu0 0.0
        %902 = vmatpush1.msra.mxu0 0.0
        %903 = vmatprep.subr.mxu0 0.0
        %904 = vmatpush1.msra.mxu0 0.0
        %905 = vmatprep.subr.mxu0 0.0
        %906 = vmatpush1.msra.mxu0 0.0
        %907 = vmatprep.subr.mxu0 0.0
        %908 = vmatpush1.msra.mxu0 0.0
        %909 = vmatprep.subr.mxu0 0.0
        %910 = vmatpush1.msra.mxu0 0.0
        %911 = vmatprep.subr.mxu0 0.0
        %912 = vmatpush1.msra.mxu0 0.0
        %913 = vmatprep.subr.mxu0 0.0
        %914 = vmatpush1.msra.mxu0 0.0
        %915 = vmatprep.subr.mxu0 0.0
        %916 = vmatpush1.msra.mxu0 0.0
        %917 = vmatprep.subr.mxu0 0.0
        %918 = vmatpush1.msra.mxu0 0.0
        %919 = vmatprep.subr.mxu0 0.0
        %920 = vmatpush1.msra.mxu0 0.0
        %921 = vmatprep.subr.mxu0 0.0
        %922 = vmatpush1.msra.mxu0 0.0
        %923 = vmatprep.subr.mxu0 0.0
        %924 = vmatpush1.msra.mxu0 0.0
        %925 = vmatprep.subr.mxu0 0.0
        %926 = vmatpush1.msra.mxu0 0.0
        %927 = vmatprep.subr.mxu0 0.0
        %928 = vmatpush1.msra.mxu0 0.0
        %929 = vmatprep.subr.mxu0 0.0
        %930 = vmatpush1.msra.mxu0 0.0
        %931 = vmatprep.subr.mxu0 0.0
        %932 = vmatpush1.msra.mxu0 0.0
        %933 = vmatprep.subr.mxu0 0.0
        %934 = vmatpush1.msra.mxu0 0.0
        %935 = vmatprep.subr.mxu0 0.0
        %936 = vmatpush1.msra.mxu0 0.0
        %937 = vmatprep.subr.mxu0 0.0
        %938 = vmatpush1.msra.mxu0 0.0
        %939 = vmatprep.subr.mxu0 0.0
        %940 = vmatpush1.msra.mxu0 0.0
        %941 = vmatprep.subr.mxu0 0.0
        %942 = vmatpush1.msra.mxu0 0.0
        %943 = vmatprep.subr.mxu0 0.0
        %944 = vmatpush1.msra.mxu0 0.0
        %945 = vmatprep.subr.mxu0 0.0
        %946 = vmatpush1.msra.mxu0 0.0
        %947 = vmatprep.subr.mxu0 0.0
        %948 = vmatpush1.msra.mxu0 0.0
        %949 = vmatprep.subr.mxu0 0.0
        %950 = vmatpush1.msra.mxu0 0.0
        %951 = vmatprep.mubr.f32.mxu0 0.0
        %v952 = vand.u32 %v704, 4294901760
        %v953 = vsub.f32 %v704, %v952
        %954 = vmatmul.mubr.f32.gmra.mrb[0].mxu0 %v953
        %v955 = vpop.f32.mrb[0].mxu0
        %v956 = vadd.f32 %v874, %v955
        %v957 = vpop.f32.mrb[0].mxu0
        %958 = vmatprep.mubr.f32.mxu0 0.0
        %v959 = vand.u32 %v707, 4294901760
        %v960 = vsub.f32 %v707, %v959
        %961 = vmatmul.mubr.f32.gmra.mrb[0].mxu0 %v960
        %v962 = vpop.f32.mrb[0].mxu0
        %v963 = vadd.f32 %v880, %v962
        %v964 = vpop.f32.mrb[0].mxu0
        %965 = vdwg.mxu0
        %966 = vmatprep.subr.mxu0 0.0
        %v967 = vand.u32 %v184, 4294901760
        %968 = vmatpush1.msra.mxu0 %v967
        %969 = vmatprep.subr.mxu0 0.0
        %v970 = vand.u32 %v185, 4294901760
        %971 = vmatpush1.msra.mxu0 %v970
        %972 = vmatprep.subr.mxu0 0.0
        %973 = vmatpush1.msra.mxu0 0.0
        %974 = vmatprep.subr.mxu0 0.0
        %975 = vmatpush1.msra.mxu0 0.0
        %976 = vmatprep.subr.mxu0 0.0
        %977 = vmatpush1.msra.mxu0 0.0
        %978 = vmatprep.subr.mxu0 0.0
        %979 = vmatpush1.msra.mxu0 0.0
        %980 = vmatprep.subr.mxu0 0.0
        %981 = vmatpush1.msra.mxu0 0.0
        %982 = vmatprep.subr.mxu0 0.0
        %983 = vmatpush1.msra.mxu0 0.0
        %984 = vmatprep.subr.mxu0 0.0
        %985 = vmatpush1.msra.mxu0 0.0
        %986 = vmatprep.subr.mxu0 0.0
        %987 = vmatpush1.msra.mxu0 0.0
        %988 = vmatprep.subr.mxu0 0.0
        %989 = vmatpush1.msra.mxu0 0.0
        %990 = vmatprep.subr.mxu0 0.0
        %991 = vmatpush1.msra.mxu0 0.0
        %992 = vmatprep.subr.mxu0 0.0
        %993 = vmatpush1.msra.mxu0 0.0
        %994 = vmatprep.subr.mxu0 0.0
        %995 = vmatpush1.msra.mxu0 0.0
        %996 = vmatprep.subr.mxu0 0.0
        %997 = vmatpush1.msra.mxu0 0.0
        %998 = vmatprep.subr.mxu0 0.0
        %999 = vmatpush1.msra.mxu0 0.0
        %1000 = vmatprep.subr.mxu0 0.0
        %1001 = vmatpush1.msra.mxu0 0.0
        %1002 = vmatprep.subr.mxu0 0.0
        %1003 = vmatpush1.msra.mxu0 0.0
        %1004 = vmatprep.subr.mxu0 0.0
        %1005 = vmatpush1.msra.mxu0 0.0
        %1006 = vmatprep.subr.mxu0 0.0
        %1007 = vmatpush1.msra.mxu0 0.0
        %1008 = vmatprep.subr.mxu0 0.0
        %1009 = vmatpush1.msra.mxu0 0.0
        %1010 = vmatprep.subr.mxu0 0.0
        %1011 = vmatpush1.msra.mxu0 0.0
        %1012 = vmatprep.subr.mxu0 0.0
        %1013 = vmatpush1.msra.mxu0 0.0
        %1014 = vmatprep.subr.mxu0 0.0
        %1015 = vmatpush1.msra.mxu0 0.0
        %1016 = vmatprep.subr.mxu0 0.0
        %1017 = vmatpush1.msra.mxu0 0.0
        %1018 = vmatprep.subr.mxu0 0.0
        %1019 = vmatpush1.msra.mxu0 0.0
        %1020 = vmatprep.subr.mxu0 0.0
        %1021 = vmatpush1.msra.mxu0 0.0
        %1022 = vmatprep.subr.mxu0 0.0
        %1023 = vmatpush1.msra.mxu0 0.0
        %1024 = vmatprep.subr.mxu0 0.0
        %1025 = vmatpush1.msra.mxu0 0.0
        %1026 = vmatprep.subr.mxu0 0.0
        %1027 = vmatpush1.msra.mxu0 0.0
        %1028 = vmatprep.subr.mxu0 0.0
        %1029 = vmatpush1.msra.mxu0 0.0
        %1030 = vmatprep.subr.mxu0 0.0
        %1031 = vmatpush1.msra.mxu0 0.0
        %1032 = vmatprep.mubr.f32.mxu0 0.0
        %v1033 = vand.u32 %v704, 4294901760
        %v1034 = vsub.f32 %v704, %v1033
        %v1035 = vand.u32 %v1034, 4294901760
        %1036 = vmatmul.mubr.f32.gmra.mrb[0].mxu0 %v1035
        %v1037 = vpop.f32.mrb[0].mxu0
        %v1038 = vadd.f32 %v956, %v1037
        %v1039 = vpop.f32.mrb[0].mxu0
        %1040 = vmatprep.mubr.f32.mxu0 0.0
        %v1041 = vand.u32 %v707, 4294901760
        %v1042 = vsub.f32 %v707, %v1041
        %v1043 = vand.u32 %v1042, 4294901760
        %1044 = vmatmul.mubr.f32.gmra.mrb[0].mxu0 %v1043
        %v1045 = vpop.f32.mrb[0].mxu0
        %v1046 = vadd.f32 %v963, %v1045
        %v1047 = vpop.f32.mrb[0].mxu0
        %1048 = vdwg.mxu0
        %1049 = vmatprep.subr.mxu0 0.0
        %v1050 = vand.u32 %v184, 4294901760
        %v1051 = vsub.f32 %v184, %v1050
        %v1052 = vand.u32 %v1051, 4294901760
        %1053 = vmatpush1.msra.mxu0 %v1052
        %1054 = vmatprep.subr.mxu0 0.0
        %v1055 = vand.u32 %v185, 4294901760
        %v1056 = vsub.f32 %v185, %v1055
        %v1057 = vand.u32 %v1056, 4294901760
        %1058 = vmatpush1.msra.mxu0 %v1057
        %1059 = vmatprep.subr.mxu0 0.0
        %1060 = vmatpush1.msra.mxu0 0.0
        %1061 = vmatprep.subr.mxu0 0.0
        %1062 = vmatpush1.msra.mxu0 0.0
        %1063 = vmatprep.subr.mxu0 0.0
        %1064 = vmatpush1.msra.mxu0 0.0
        %1065 = vmatprep.subr.mxu0 0.0
        %1066 = vmatpush1.msra.mxu0 0.0
        %1067 = vmatprep.subr.mxu0 0.0
        %1068 = vmatpush1.msra.mxu0 0.0
        %1069 = vmatprep.subr.mxu0 0.0
        %1070 = vmatpush1.msra.mxu0 0.0
        %1071 = vmatprep.subr.mxu0 0.0
        %1072 = vmatpush1.msra.mxu0 0.0
        %1073 = vmatprep.subr.mxu0 0.0
        %1074 = vmatpush1.msra.mxu0 0.0
        %1075 = vmatprep.subr.mxu0 0.0
        %1076 = vmatpush1.msra.mxu0 0.0
        %1077 = vmatprep.subr.mxu0 0.0
        %1078 = vmatpush1.msra.mxu0 0.0
        %1079 = vmatprep.subr.mxu0 0.0
        %1080 = vmatpush1.msra.mxu0 0.0
        %1081 = vmatprep.subr.mxu0 0.0
        %1082 = vmatpush1.msra.mxu0 0.0
        %1083 = vmatprep.subr.mxu0 0.0
        %1084 = vmatpush1.msra.mxu0 0.0
        %1085 = vmatprep.subr.mxu0 0.0
        %1086 = vmatpush1.msra.mxu0 0.0
        %1087 = vmatprep.subr.mxu0 0.0
        %1088 = vmatpush1.msra.mxu0 0.0
        %1089 = vmatprep.subr.mxu0 0.0
        %1090 = vmatpush1.msra.mxu0 0.0
        %1091 = vmatprep.subr.mxu0 0.0
        %1092 = vmatpush1.msra.mxu0 0.0
        %1093 = vmatprep.subr.mxu0 0.0
        %1094 = vmatpush1.msra.mxu0 0.0
        %1095 = vmatprep.subr.mxu0 0.0
        %1096 = vmatpush1.msra.mxu0 0.0
        %1097 = vmatprep.subr.mxu0 0.0
        %1098 = vmatpush1.msra.mxu0 0.0
        %1099 = vmatprep.subr.mxu0 0.0
        %1100 = vmatpush1.msra.mxu0 0.0
        %1101 = vmatprep.subr.mxu0 0.0
        %1102 = vmatpush1.msra.mxu0 0.0
        %1103 = vmatprep.subr.mxu0 0.0
        %1104 = vmatpush1.msra.mxu0 0.0
        %1105 = vmatprep.subr.mxu0 0.0
        %1106 = vmatpush1.msra.mxu0 0.0
        %1107 = vmatprep.subr.mxu0 0.0
        %1108 = vmatpush1.msra.mxu0 0.0
        %1109 = vmatprep.subr.mxu0 0.0
        %1110 = vmatpush1.msra.mxu0 0.0
        %1111 = vmatprep.subr.mxu0 0.0
        %1112 = vmatpush1.msra.mxu0 0.0
        %1113 = vmatprep.subr.mxu0 0.0
        %1114 = vmatpush1.msra.mxu0 0.0
        %1115 = vmatprep.subr.mxu0 0.0
        %1116 = vmatpush1.msra.mxu0 0.0
        %1117 = vmatprep.subr.mxu0 0.0
        %1118 = vmatpush1.msra.mxu0 0.0
        %1119 = vmatprep.mubr.f32.mxu0 0.0
        %v1120 = vand.u32 %v704, 4294901760
        %1121 = vmatmul.mubr.f32.gmra.mrb[0].mxu0 %v1120
        %v1122 = vpop.f32.mrb[0].mxu0
        %v1123 = vadd.f32 %v1038, %v1122
        %v1124 = vpop.f32.mrb[0].mxu0
        %1125 = vmatprep.mubr.f32.mxu0 0.0
        %v1126 = vand.u32 %v707, 4294901760
        %1127 = vmatmul.mubr.f32.gmra.mrb[0].mxu0 %v1126
        %v1128 = vpop.f32.mrb[0].mxu0
        %v1129 = vadd.f32 %v1046, %v1128
        %v1130 = vpop.f32.mrb[0].mxu0
        %1131 = vdwg.mxu0
        %1132 = vmatprep.subr.mxu0 0.0
        %v1133 = vand.u32 %v184, 4294901760
        %1134 = vmatpush1.msra.mxu0 %v1133
        %1135 = vmatprep.subr.mxu0 0.0
        %v1136 = vand.u32 %v185, 4294901760
        %1137 = vmatpush1.msra.mxu0 %v1136
        %1138 = vmatprep.subr.mxu0 0.0
        %1139 = vmatpush1.msra.mxu0 0.0
        %1140 = vmatprep.subr.mxu0 0.0
        %1141 = vmatpush1.msra.mxu0 0.0
        %1142 = vmatprep.subr.mxu0 0.0
        %1143 = vmatpush1.msra.mxu0 0.0
        %1144 = vmatprep.subr.mxu0 0.0
        %1145 = vmatpush1.msra.mxu0 0.0
        %1146 = vmatprep.subr.mxu0 0.0
        %1147 = vmatpush1.msra.mxu0 0.0
        %1148 = vmatprep.subr.mxu0 0.0
        %1149 = vmatpush1.msra.mxu0 0.0
        %1150 = vmatprep.subr.mxu0 0.0
        %1151 = vmatpush1.msra.mxu0 0.0
        %1152 = vmatprep.subr.mxu0 0.0
        %1153 = vmatpush1.msra.mxu0 0.0
        %1154 = vmatprep.subr.mxu0 0.0
        %1155 = vmatpush1.msra.mxu0 0.0
        %1156 = vmatprep.subr.mxu0 0.0
        %1157 = vmatpush1.msra.mxu0 0.0
        %1158 = vmatprep.subr.mxu0 0.0
        %1159 = vmatpush1.msra.mxu0 0.0
        %1160 = vmatprep.subr.mxu0 0.0
        %1161 = vmatpush1.msra.mxu0 0.0
        %1162 = vmatprep.subr.mxu0 0.0
        %1163 = vmatpush1.msra.mxu0 0.0
        %1164 = vmatprep.subr.mxu0 0.0
        %1165 = vmatpush1.msra.mxu0 0.0
        %1166 = vmatprep.subr.mxu0 0.0
        %1167 = vmatpush1.msra.mxu0 0.0
        %1168 = vmatprep.subr.mxu0 0.0
        %1169 = vmatpush1.msra.mxu0 0.0
        %1170 = vmatprep.subr.mxu0 0.0
        %1171 = vmatpush1.msra.mxu0 0.0
        %1172 = vmatprep.subr.mxu0 0.0
        %1173 = vmatpush1.msra.mxu0 0.0
        %1174 = vmatprep.subr.mxu0 0.0
        %1175 = vmatpush1.msra.mxu0 0.0
        %1176 = vmatprep.subr.mxu0 0.0
        %1177 = vmatpush1.msra.mxu0 0.0
        %1178 = vmatprep.subr.mxu0 0.0
        %1179 = vmatpush1.msra.mxu0 0.0
        %1180 = vmatprep.subr.mxu0 0.0
        %1181 = vmatpush1.msra.mxu0 0.0
        %1182 = vmatprep.subr.mxu0 0.0
        %1183 = vmatpush1.msra.mxu0 0.0
        %1184 = vmatprep.subr.mxu0 0.0
        %1185 = vmatpush1.msra.mxu0 0.0
        %1186 = vmatprep.subr.mxu0 0.0
        %1187 = vmatpush1.msra.mxu0 0.0
        %1188 = vmatprep.subr.mxu0 0.0
        %1189 = vmatpush1.msra.mxu0 0.0
        %1190 = vmatprep.subr.mxu0 0.0
        %1191 = vmatpush1.msra.mxu0 0.0
        %1192 = vmatprep.subr.mxu0 0.0
        %1193 = vmatpush1.msra.mxu0 0.0
        %1194 = vmatprep.subr.mxu0 0.0
        %1195 = vmatpush1.msra.mxu0 0.0
        %1196 = vmatprep.subr.mxu0 0.0
        %1197 = vmatpush1.msra.mxu0 0.0
        %1198 = vmatprep.mubr.f32.mxu0 0.0
        %v1199 = vand.u32 %v704, 4294901760
        %1200 = vmatmul.mubr.f32.gmra.mrb[0].mxu0 %v1199
        %v1201 = vpop.f32.mrb[0].mxu0
        %v1202 = vadd.f32 %v1123, %v1201
        %v1203 = vpop.f32.mrb[0].mxu0
        %1204 = vmatprep.mubr.f32.mxu0 0.0
        %v1205 = vand.u32 %v707, 4294901760
        %1206 = vmatmul.mubr.f32.gmra.mrb[0].mxu0 %v1205
        %v1207 = vpop.f32.mrb[0].mxu0
        %v1208 = vadd.f32 %v1129, %v1207
        %v1209 = vpop.f32.mrb[0].mxu0
        %1210 = vdwg.mxu0
        %v1212 = vsel %vm194, %v190, 0
        %v1215 = vsel %vm194, %v191, 0
        %1217 = vmatprep.subr.mxu0 0.0
        %v1218 = vand.u32 %v184, 4294901760
        %1219 = vmatpush1.msra.mxu0 %v1218
        %1220 = vmatprep.subr.mxu0 0.0
        %v1221 = vand.u32 %v185, 4294901760
        %1222 = vmatpush1.msra.mxu0 %v1221
        %1223 = vmatprep.subr.mxu0 0.0
        %1224 = vmatpush1.msra.mxu0 0.0
        %1225 = vmatprep.subr.mxu0 0.0
        %1226 = vmatpush1.msra.mxu0 0.0
        %1227 = vmatprep.subr.mxu0 0.0
        %1228 = vmatpush1.msra.mxu0 0.0
        %1229 = vmatprep.subr.mxu0 0.0
        %1230 = vmatpush1.msra.mxu0 0.0
        %1231 = vmatprep.subr.mxu0 0.0
        %1232 = vmatpush1.msra.mxu0 0.0
        %1233 = vmatprep.subr.mxu0 0.0
        %1234 = vmatpush1.msra.mxu0 0.0
        %1235 = vmatprep.subr.mxu0 0.0
        %1236 = vmatpush1.msra.mxu0 0.0
        %1237 = vmatprep.subr.mxu0 0.0
        %1238 = vmatpush1.msra.mxu0 0.0
        %1239 = vmatprep.subr.mxu0 0.0
        %1240 = vmatpush1.msra.mxu0 0.0
        %1241 = vmatprep.subr.mxu0 0.0
        %1242 = vmatpush1.msra.mxu0 0.0
        %1243 = vmatprep.subr.mxu0 0.0
        %1244 = vmatpush1.msra.mxu0 0.0
        %1245 = vmatprep.subr.mxu0 0.0
        %1246 = vmatpush1.msra.mxu0 0.0
        %1247 = vmatprep.subr.mxu0 0.0
        %1248 = vmatpush1.msra.mxu0 0.0
        %1249 = vmatprep.subr.mxu0 0.0
        %1250 = vmatpush1.msra.mxu0 0.0
        %1251 = vmatprep.subr.mxu0 0.0
        %1252 = vmatpush1.msra.mxu0 0.0
        %1253 = vmatprep.subr.mxu0 0.0
        %1254 = vmatpush1.msra.mxu0 0.0
        %1255 = vmatprep.subr.mxu0 0.0
        %1256 = vmatpush1.msra.mxu0 0.0
        %1257 = vmatprep.subr.mxu0 0.0
        %1258 = vmatpush1.msra.mxu0 0.0
        %1259 = vmatprep.subr.mxu0 0.0
        %1260 = vmatpush1.msra.mxu0 0.0
        %1261 = vmatprep.subr.mxu0 0.0
        %1262 = vmatpush1.msra.mxu0 0.0
        %1263 = vmatprep.subr.mxu0 0.0
        %1264 = vmatpush1.msra.mxu0 0.0
        %1265 = vmatprep.subr.mxu0 0.0
        %1266 = vmatpush1.msra.mxu0 0.0
        %1267 = vmatprep.subr.mxu0 0.0
        %1268 = vmatpush1.msra.mxu0 0.0
        %1269 = vmatprep.subr.mxu0 0.0
        %1270 = vmatpush1.msra.mxu0 0.0
        %1271 = vmatprep.subr.mxu0 0.0
        %1272 = vmatpush1.msra.mxu0 0.0
        %1273 = vmatprep.subr.mxu0 0.0
        %1274 = vmatpush1.msra.mxu0 0.0
        %1275 = vmatprep.subr.mxu0 0.0
        %1276 = vmatpush1.msra.mxu0 0.0
        %1277 = vmatprep.subr.mxu0 0.0
        %1278 = vmatpush1.msra.mxu0 0.0
        %1279 = vmatprep.subr.mxu0 0.0
        %1280 = vmatpush1.msra.mxu0 0.0
        %1281 = vmatprep.subr.mxu0 0.0
        %1282 = vmatpush1.msra.mxu0 0.0
        %1283 = vmatprep.mubr.f32.mxu0 0.0
        %v1284 = vand.u32 %v1212, 4294901760
        %v1285 = vsub.f32 %v1212, %v1284
        %v1286 = vand.u32 %v1285, 4294901760
        %v1287 = vsub.f32 %v1285, %v1286
        %v1288 = vand.u32 %v1287, 4294901760
        %1289 = vmatmul.mubr.f32.gmra.mrb[0].mxu0 %v1288
        %v1290 = vpop.f32.mrb[0].mxu0
        %v1291 = vadd.f32 0.0, %v1290
        %v1292 = vpop.f32.mrb[0].mxu0
        %1293 = vmatprep.mubr.f32.mxu0 0.0
        %v1294 = vand.u32 %v1215, 4294901760
        %v1295 = vsub.f32 %v1215, %v1294
        %v1296 = vand.u32 %v1295, 4294901760
        %v1297 = vsub.f32 %v1295, %v1296
        %v1298 = vand.u32 %v1297, 4294901760
        %1299 = vmatmul.mubr.f32.gmra.mrb[0].mxu0 %v1298
        %v1300 = vpop.f32.mrb[0].mxu0
        %v1301 = vadd.f32 0.0, %v1300
        %v1302 = vpop.f32.mrb[0].mxu0
        %1303 = vdwg.mxu0
        %1304 = vmatprep.subr.mxu0 0.0
        %v1305 = vand.u32 %v184, 4294901760
        %v1306 = vsub.f32 %v184, %v1305
        %v1307 = vand.u32 %v1306, 4294901760
        %v1308 = vsub.f32 %v1306, %v1307
        %v1309 = vand.u32 %v1308, 4294901760
        %1310 = vmatpush1.msra.mxu0 %v1309
        %1311 = vmatprep.subr.mxu0 0.0
        %v1312 = vand.u32 %v185, 4294901760
        %v1313 = vsub.f32 %v185, %v1312
        %v1314 = vand.u32 %v1313, 4294901760
        %v1315 = vsub.f32 %v1313, %v1314
        %v1316 = vand.u32 %v1315, 4294901760
        %1317 = vmatpush1.msra.mxu0 %v1316
        %1318 = vmatprep.subr.mxu0 0.0
        %1319 = vmatpush1.msra.mxu0 0.0
        %1320 = vmatprep.subr.mxu0 0.0
        %1321 = vmatpush1.msra.mxu0 0.0
        %1322 = vmatprep.subr.mxu0 0.0
        %1323 = vmatpush1.msra.mxu0 0.0
        %1324 = vmatprep.subr.mxu0 0.0
        %1325 = vmatpush1.msra.mxu0 0.0
        %1326 = vmatprep.subr.mxu0 0.0
        %1327 = vmatpush1.msra.mxu0 0.0
        %1328 = vmatprep.subr.mxu0 0.0
        %1329 = vmatpush1.msra.mxu0 0.0
        %1330 = vmatprep.subr.mxu0 0.0
        %1331 = vmatpush1.msra.mxu0 0.0
        %1332 = vmatprep.subr.mxu0 0.0
        %1333 = vmatpush1.msra.mxu0 0.0
        %1334 = vmatprep.subr.mxu0 0.0
        %1335 = vmatpush1.msra.mxu0 0.0
        %1336 = vmatprep.subr.mxu0 0.0
        %1337 = vmatpush1.msra.mxu0 0.0
        %1338 = vmatprep.subr.mxu0 0.0
        %1339 = vmatpush1.msra.mxu0 0.0
        %1340 = vmatprep.subr.mxu0 0.0
        %1341 = vmatpush1.msra.mxu0 0.0
        %1342 = vmatprep.subr.mxu0 0.0
        %1343 = vmatpush1.msra.mxu0 0.0
        %1344 = vmatprep.subr.mxu0 0.0
        %1345 = vmatpush1.msra.mxu0 0.0
        %1346 = vmatprep.subr.mxu0 0.0
        %1347 = vmatpush1.msra.mxu0 0.0
        %1348 = vmatprep.subr.mxu0 0.0
        %1349 = vmatpush1.msra.mxu0 0.0
        %1350 = vmatprep.subr.mxu0 0.0
        %1351 = vmatpush1.msra.mxu0 0.0
        %1352 = vmatprep.subr.mxu0 0.0
        %1353 = vmatpush1.msra.mxu0 0.0
        %1354 = vmatprep.subr.mxu0 0.0
        %1355 = vmatpush1.msra.mxu0 0.0
        %1356 = vmatprep.subr.mxu0 0.0
        %1357 = vmatpush1.msra.mxu0 0.0
        %1358 = vmatprep.subr.mxu0 0.0
        %1359 = vmatpush1.msra.mxu0 0.0
        %1360 = vmatprep.subr.mxu0 0.0
        %1361 = vmatpush1.msra.mxu0 0.0
        %1362 = vmatprep.subr.mxu0 0.0
        %1363 = vmatpush1.msra.mxu0 0.0
        %1364 = vmatprep.subr.mxu0 0.0
        %1365 = vmatpush1.msra.mxu0 0.0
        %1366 = vmatprep.subr.mxu0 0.0
        %1367 = vmatpush1.msra.mxu0 0.0
        %1368 = vmatprep.subr.mxu0 0.0
        %1369 = vmatpush1.msra.mxu0 0.0
        %1370 = vmatprep.subr.mxu0 0.0
        %1371 = vmatpush1.msra.mxu0 0.0
        %1372 = vmatprep.subr.mxu0 0.0
        %1373 = vmatpush1.msra.mxu0 0.0
        %1374 = vmatprep.subr.mxu0 0.0
        %1375 = vmatpush1.msra.mxu0 0.0
        %1376 = vmatprep.subr.mxu0 0.0
        %1377 = vmatpush1.msra.mxu0 0.0
        %1378 = vmatprep.mubr.f32.mxu0 0.0
        %v1379 = vand.u32 %v1212, 4294901760
        %1380 = vmatmul.mubr.f32.gmra.mrb[0].mxu0 %v1379
        %v1381 = vpop.f32.mrb[0].mxu0
        %v1382 = vadd.f32 %v1291, %v1381
        %v1383 = vpop.f32.mrb[0].mxu0
        %1384 = vmatprep.mubr.f32.mxu0 0.0
        %v1385 = vand.u32 %v1215, 4294901760
        %1386 = vmatmul.mubr.f32.gmra.mrb[0].mxu0 %v1385
        %v1387 = vpop.f32.mrb[0].mxu0
        %v1388 = vadd.f32 %v1301, %v1387
        %v1389 = vpop.f32.mrb[0].mxu0
        %1390 = vdwg.mxu0
        %1391 = vmatprep.subr.mxu0 0.0
        %v1392 = vand.u32 %v184, 4294901760
        %v1393 = vsub.f32 %v184, %v1392
        %1394 = vmatpush1.msra.mxu0 %v1393
        %1395 = vmatprep.subr.mxu0 0.0
        %v1396 = vand.u32 %v185, 4294901760
        %v1397 = vsub.f32 %v185, %v1396
        %1398 = vmatpush1.msra.mxu0 %v1397
        %1399 = vmatprep.subr.mxu0 0.0
        %1400 = vmatpush1.msra.mxu0 0.0
        %1401 = vmatprep.subr.mxu0 0.0
        %1402 = vmatpush1.msra.mxu0 0.0
        %1403 = vmatprep.subr.mxu0 0.0
        %1404 = vmatpush1.msra.mxu0 0.0
        %1405 = vmatprep.subr.mxu0 0.0
        %1406 = vmatpush1.msra.mxu0 0.0
        %1407 = vmatprep.subr.mxu0 0.0
        %1408 = vmatpush1.msra.mxu0 0.0
        %1409 = vmatprep.subr.mxu0 0.0
        %1410 = vmatpush1.msra.mxu0 0.0
        %1411 = vmatprep.subr.mxu0 0.0
        %1412 = vmatpush1.msra.mxu0 0.0
        %1413 = vmatprep.subr.mxu0 0.0
        %1414 = vmatpush1.msra.mxu0 0.0
        %1415 = vmatprep.subr.mxu0 0.0
        %1416 = vmatpush1.msra.mxu0 0.0
        %1417 = vmatprep.subr.mxu0 0.0
        %1418 = vmatpush1.msra.mxu0 0.0
        %1419 = vmatprep.subr.mxu0 0.0
        %1420 = vmatpush1.msra.mxu0 0.0
        %1421 = vmatprep.subr.mxu0 0.0
        %1422 = vmatpush1.msra.mxu0 0.0
        %1423 = vmatprep.subr.mxu0 0.0
        %1424 = vmatpush1.msra.mxu0 0.0
        %1425 = vmatprep.subr.mxu0 0.0
        %1426 = vmatpush1.msra.mxu0 0.0
        %1427 = vmatprep.subr.mxu0 0.0
        %1428 = vmatpush1.msra.mxu0 0.0
        %1429 = vmatprep.subr.mxu0 0.0
        %1430 = vmatpush1.msra.mxu0 0.0
        %1431 = vmatprep.subr.mxu0 0.0
        %1432 = vmatpush1.msra.mxu0 0.0
        %1433 = vmatprep.subr.mxu0 0.0
        %1434 = vmatpush1.msra.mxu0 0.0
        %1435 = vmatprep.subr.mxu0 0.0
        %1436 = vmatpush1.msra.mxu0 0.0
        %1437 = vmatprep.subr.mxu0 0.0
        %1438 = vmatpush1.msra.mxu0 0.0
        %1439 = vmatprep.subr.mxu0 0.0
        %1440 = vmatpush1.msra.mxu0 0.0
        %1441 = vmatprep.subr.mxu0 0.0
        %1442 = vmatpush1.msra.mxu0 0.0
        %1443 = vmatprep.subr.mxu0 0.0
        %1444 = vmatpush1.msra.mxu0 0.0
        %1445 = vmatprep.subr.mxu0 0.0
        %1446 = vmatpush1.msra.mxu0 0.0
        %1447 = vmatprep.subr.mxu0 0.0
        %1448 = vmatpush1.msra.mxu0 0.0
        %1449 = vmatprep.subr.mxu0 0.0
        %1450 = vmatpush1.msra.mxu0 0.0
        %1451 = vmatprep.subr.mxu0 0.0
        %1452 = vmatpush1.msra.mxu0 0.0
        %1453 = vmatprep.subr.mxu0 0.0
        %1454 = vmatpush1.msra.mxu0 0.0
        %1455 = vmatprep.subr.mxu0 0.0
        %1456 = vmatpush1.msra.mxu0 0.0
        %1457 = vmatprep.subr.mxu0 0.0
        %1458 = vmatpush1.msra.mxu0 0.0
        %1459 = vmatprep.mubr.f32.mxu0 0.0
        %v1460 = vand.u32 %v1212, 4294901760
        %v1461 = vsub.f32 %v1212, %v1460
        %1462 = vmatmul.mubr.f32.gmra.mrb[0].mxu0 %v1461
        %v1463 = vpop.f32.mrb[0].mxu0
        %v1464 = vadd.f32 %v1382, %v1463
        %v1465 = vpop.f32.mrb[0].mxu0
        %1466 = vmatprep.mubr.f32.mxu0 0.0
        %v1467 = vand.u32 %v1215, 4294901760
        %v1468 = vsub.f32 %v1215, %v1467
        %1469 = vmatmul.mubr.f32.gmra.mrb[0].mxu0 %v1468
        %v1470 = vpop.f32.mrb[0].mxu0
        %v1471 = vadd.f32 %v1388, %v1470
        %v1472 = vpop.f32.mrb[0].mxu0
        %1473 = vdwg.mxu0
        %1474 = vmatprep.subr.mxu0 0.0
        %v1475 = vand.u32 %v184, 4294901760
        %1476 = vmatpush1.msra.mxu0 %v1475
        %1477 = vmatprep.subr.mxu0 0.0
        %v1478 = vand.u32 %v185, 4294901760
        %1479 = vmatpush1.msra.mxu0 %v1478
        %1480 = vmatprep.subr.mxu0 0.0
        %1481 = vmatpush1.msra.mxu0 0.0
        %1482 = vmatprep.subr.mxu0 0.0
        %1483 = vmatpush1.msra.mxu0 0.0
        %1484 = vmatprep.subr.mxu0 0.0
        %1485 = vmatpush1.msra.mxu0 0.0
        %1486 = vmatprep.subr.mxu0 0.0
        %1487 = vmatpush1.msra.mxu0 0.0
        %1488 = vmatprep.subr.mxu0 0.0
        %1489 = vmatpush1.msra.mxu0 0.0
        %1490 = vmatprep.subr.mxu0 0.0
        %1491 = vmatpush1.msra.mxu0 0.0
        %1492 = vmatprep.subr.mxu0 0.0
        %1493 = vmatpush1.msra.mxu0 0.0
        %1494 = vmatprep.subr.mxu0 0.0
        %1495 = vmatpush1.msra.mxu0 0.0
        %1496 = vmatprep.subr.mxu0 0.0
        %1497 = vmatpush1.msra.mxu0 0.0
        %1498 = vmatprep.subr.mxu0 0.0
        %1499 = vmatpush1.msra.mxu0 0.0
        %1500 = vmatprep.subr.mxu0 0.0
        %1501 = vmatpush1.msra.mxu0 0.0
        %1502 = vmatprep.subr.mxu0 0.0
        %1503 = vmatpush1.msra.mxu0 0.0
        %1504 = vmatprep.subr.mxu0 0.0
        %1505 = vmatpush1.msra.mxu0 0.0
        %1506 = vmatprep.subr.mxu0 0.0
        %1507 = vmatpush1.msra.mxu0 0.0
        %1508 = vmatprep.subr.mxu0 0.0
        %1509 = vmatpush1.msra.mxu0 0.0
        %1510 = vmatprep.subr.mxu0 0.0
        %1511 = vmatpush1.msra.mxu0 0.0
        %1512 = vmatprep.subr.mxu0 0.0
        %1513 = vmatpush1.msra.mxu0 0.0
        %1514 = vmatprep.subr.mxu0 0.0
        %1515 = vmatpush1.msra.mxu0 0.0
        %1516 = vmatprep.subr.mxu0 0.0
        %1517 = vmatpush1.msra.mxu0 0.0
        %1518 = vmatprep.subr.mxu0 0.0
        %1519 = vmatpush1.msra.mxu0 0.0
        %1520 = vmatprep.subr.mxu0 0.0
        %1521 = vmatpush1.msra.mxu0 0.0
        %1522 = vmatprep.subr.mxu0 0.0
        %1523 = vmatpush1.msra.mxu0 0.0
        %1524 = vmatprep.subr.mxu0 0.0
        %1525 = vmatpush1.msra.mxu0 0.0
        %1526 = vmatprep.subr.mxu0 0.0
        %1527 = vmatpush1.msra.mxu0 0.0
        %1528 = vmatprep.subr.mxu0 0.0
        %1529 = vmatpush1.msra.mxu0 0.0
        %1530 = vmatprep.subr.mxu0 0.0
        %1531 = vmatpush1.msra.mxu0 0.0
        %1532 = vmatprep.subr.mxu0 0.0
        %1533 = vmatpush1.msra.mxu0 0.0
        %1534 = vmatprep.subr.mxu0 0.0
        %1535 = vmatpush1.msra.mxu0 0.0
        %1536 = vmatprep.subr.mxu0 0.0
        %1537 = vmatpush1.msra.mxu0 0.0
        %1538 = vmatprep.subr.mxu0 0.0
        %1539 = vmatpush1.msra.mxu0 0.0
        %1540 = vmatprep.mubr.f32.mxu0 0.0
        %v1541 = vand.u32 %v1212, 4294901760
        %v1542 = vsub.f32 %v1212, %v1541
        %v1543 = vand.u32 %v1542, 4294901760
        %1544 = vmatmul.mubr.f32.gmra.mrb[0].mxu0 %v1543
        %v1545 = vpop.f32.mrb[0].mxu0
        %v1546 = vadd.f32 %v1464, %v1545
        %v1547 = vpop.f32.mrb[0].mxu0
        %1548 = vmatprep.mubr.f32.mxu0 0.0
        %v1549 = vand.u32 %v1215, 4294901760
        %v1550 = vsub.f32 %v1215, %v1549
        %v1551 = vand.u32 %v1550, 4294901760
        %1552 = vmatmul.mubr.f32.gmra.mrb[0].mxu0 %v1551
        %v1553 = vpop.f32.mrb[0].mxu0
        %v1554 = vadd.f32 %v1471, %v1553
        %v1555 = vpop.f32.mrb[0].mxu0
        %1556 = vdwg.mxu0
        %1557 = vmatprep.subr.mxu0 0.0
        %v1558 = vand.u32 %v184, 4294901760
        %v1559 = vsub.f32 %v184, %v1558
        %v1560 = vand.u32 %v1559, 4294901760
        %1561 = vmatpush1.msra.mxu0 %v1560
        %1562 = vmatprep.subr.mxu0 0.0
        %v1563 = vand.u32 %v185, 4294901760
        %v1564 = vsub.f32 %v185, %v1563
        %v1565 = vand.u32 %v1564, 4294901760
        %1566 = vmatpush1.msra.mxu0 %v1565
        %1567 = vmatprep.subr.mxu0 0.0
        %1568 = vmatpush1.msra.mxu0 0.0
        %1569 = vmatprep.subr.mxu0 0.0
        %1570 = vmatpush1.msra.mxu0 0.0
        %1571 = vmatprep.subr.mxu0 0.0
        %1572 = vmatpush1.msra.mxu0 0.0
        %1573 = vmatprep.subr.mxu0 0.0
        %1574 = vmatpush1.msra.mxu0 0.0
        %1575 = vmatprep.subr.mxu0 0.0
        %1576 = vmatpush1.msra.mxu0 0.0
        %1577 = vmatprep.subr.mxu0 0.0
        %1578 = vmatpush1.msra.mxu0 0.0
        %1579 = vmatprep.subr.mxu0 0.0
        %1580 = vmatpush1.msra.mxu0 0.0
        %1581 = vmatprep.subr.mxu0 0.0
        %1582 = vmatpush1.msra.mxu0 0.0
        %1583 = vmatprep.subr.mxu0 0.0
        %1584 = vmatpush1.msra.mxu0 0.0
        %1585 = vmatprep.subr.mxu0 0.0
        %1586 = vmatpush1.msra.mxu0 0.0
        %1587 = vmatprep.subr.mxu0 0.0
        %1588 = vmatpush1.msra.mxu0 0.0
        %1589 = vmatprep.subr.mxu0 0.0
        %1590 = vmatpush1.msra.mxu0 0.0
        %1591 = vmatprep.subr.mxu0 0.0
        %1592 = vmatpush1.msra.mxu0 0.0
        %1593 = vmatprep.subr.mxu0 0.0
        %1594 = vmatpush1.msra.mxu0 0.0
        %1595 = vmatprep.subr.mxu0 0.0
        %1596 = vmatpush1.msra.mxu0 0.0
        %1597 = vmatprep.subr.mxu0 0.0
        %1598 = vmatpush1.msra.mxu0 0.0
        %1599 = vmatprep.subr.mxu0 0.0
        %1600 = vmatpush1.msra.mxu0 0.0
        %1601 = vmatprep.subr.mxu0 0.0
        %1602 = vmatpush1.msra.mxu0 0.0
        %1603 = vmatprep.subr.mxu0 0.0
        %1604 = vmatpush1.msra.mxu0 0.0
        %1605 = vmatprep.subr.mxu0 0.0
        %1606 = vmatpush1.msra.mxu0 0.0
        %1607 = vmatprep.subr.mxu0 0.0
        %1608 = vmatpush1.msra.mxu0 0.0
        %1609 = vmatprep.subr.mxu0 0.0
        %1610 = vmatpush1.msra.mxu0 0.0
        %1611 = vmatprep.subr.mxu0 0.0
        %1612 = vmatpush1.msra.mxu0 0.0
        %1613 = vmatprep.subr.mxu0 0.0
        %1614 = vmatpush1.msra.mxu0 0.0
        %1615 = vmatprep.subr.mxu0 0.0
        %1616 = vmatpush1.msra.mxu0 0.0
        %1617 = vmatprep.subr.mxu0 0.0
        %1618 = vmatpush1.msra.mxu0 0.0
        %1619 = vmatprep.subr.mxu0 0.0
        %1620 = vmatpush1.msra.mxu0 0.0
        %1621 = vmatprep.subr.mxu0 0.0
        %1622 = vmatpush1.msra.mxu0 0.0
        %1623 = vmatprep.subr.mxu0 0.0
        %1624 = vmatpush1.msra.mxu0 0.0
        %1625 = vmatprep.subr.mxu0 0.0
        %1626 = vmatpush1.msra.mxu0 0.0
        %1627 = vmatprep.mubr.f32.mxu0 0.0
        %v1628 = vand.u32 %v1212, 4294901760
        %1629 = vmatmul.mubr.f32.gmra.mrb[0].mxu0 %v1628
        %v1630 = vpop.f32.mrb[0].mxu0
        %v1631 = vadd.f32 %v1546, %v1630
        %v1632 = vpop.f32.mrb[0].mxu0
        %1633 = vmatprep.mubr.f32.mxu0 0.0
        %v1634 = vand.u32 %v1215, 4294901760
        %1635 = vmatmul.mubr.f32.gmra.mrb[0].mxu0 %v1634
        %v1636 = vpop.f32.mrb[0].mxu0
        %v1637 = vadd.f32 %v1554, %v1636
        %v1638 = vpop.f32.mrb[0].mxu0
        %1639 = vdwg.mxu0
        %1640 = vmatprep.subr.mxu0 0.0
        %v1641 = vand.u32 %v184, 4294901760
        %1642 = vmatpush1.msra.mxu0 %v1641
        %1643 = vmatprep.subr.mxu0 0.0
        %v1644 = vand.u32 %v185, 4294901760
        %1645 = vmatpush1.msra.mxu0 %v1644
        %1646 = vmatprep.subr.mxu0 0.0
        %1647 = vmatpush1.msra.mxu0 0.0
        %1648 = vmatprep.subr.mxu0 0.0
        %1649 = vmatpush1.msra.mxu0 0.0
        %1650 = vmatprep.subr.mxu0 0.0
        %1651 = vmatpush1.msra.mxu0 0.0
        %1652 = vmatprep.subr.mxu0 0.0
        %1653 = vmatpush1.msra.mxu0 0.0
        %1654 = vmatprep.subr.mxu0 0.0
        %1655 = vmatpush1.msra.mxu0 0.0
        %1656 = vmatprep.subr.mxu0 0.0
        %1657 = vmatpush1.msra.mxu0 0.0
        %1658 = vmatprep.subr.mxu0 0.0
        %1659 = vmatpush1.msra.mxu0 0.0
        %1660 = vmatprep.subr.mxu0 0.0
        %1661 = vmatpush1.msra.mxu0 0.0
        %1662 = vmatprep.subr.mxu0 0.0
        %1663 = vmatpush1.msra.mxu0 0.0
        %1664 = vmatprep.subr.mxu0 0.0
        %1665 = vmatpush1.msra.mxu0 0.0
        %1666 = vmatprep.subr.mxu0 0.0
        %1667 = vmatpush1.msra.mxu0 0.0
        %1668 = vmatprep.subr.mxu0 0.0
        %1669 = vmatpush1.msra.mxu0 0.0
        %1670 = vmatprep.subr.mxu0 0.0
        %1671 = vmatpush1.msra.mxu0 0.0
        %1672 = vmatprep.subr.mxu0 0.0
        %1673 = vmatpush1.msra.mxu0 0.0
        %1674 = vmatprep.subr.mxu0 0.0
        %1675 = vmatpush1.msra.mxu0 0.0
        %1676 = vmatprep.subr.mxu0 0.0
        %1677 = vmatpush1.msra.mxu0 0.0
        %1678 = vmatprep.subr.mxu0 0.0
        %1679 = vmatpush1.msra.mxu0 0.0
        %1680 = vmatprep.subr.mxu0 0.0
        %1681 = vmatpush1.msra.mxu0 0.0
        %1682 = vmatprep.subr.mxu0 0.0
        %1683 = vmatpush1.msra.mxu0 0.0
        %1684 = vmatprep.subr.mxu0 0.0
        %1685 = vmatpush1.msra.mxu0 0.0
        %1686 = vmatprep.subr.mxu0 0.0
        %1687 = vmatpush1.msra.mxu0 0.0
        %1688 = vmatprep.subr.mxu0 0.0
        %1689 = vmatpush1.msra.mxu0 0.0
        %1690 = vmatprep.subr.mxu0 0.0
        %1691 = vmatpush1.msra.mxu0 0.0
        %1692 = vmatprep.subr.mxu0 0.0
        %1693 = vmatpush1.msra.mxu0 0.0
        %1694 = vmatprep.subr.mxu0 0.0
        %1695 = vmatpush1.msra.mxu0 0.0
        %1696 = vmatprep.subr.mxu0 0.0
        %1697 = vmatpush1.msra.mxu0 0.0
        %1698 = vmatprep.subr.mxu0 0.0
        %1699 = vmatpush1.msra.mxu0 0.0
        %1700 = vmatprep.subr.mxu0 0.0
        %1701 = vmatpush1.msra.mxu0 0.0
        %1702 = vmatprep.subr.mxu0 0.0
        %1703 = vmatpush1.msra.mxu0 0.0
        %1704 = vmatprep.subr.mxu0 0.0
        %1705 = vmatpush1.msra.mxu0 0.0
        %1706 = vmatprep.mubr.f32.mxu0 0.0
        %v1707 = vand.u32 %v1212, 4294901760
        %1708 = vmatmul.mubr.f32.gmra.mrb[0].mxu0 %v1707
        %v1709 = vpop.f32.mrb[0].mxu0
        %v1710 = vadd.f32 %v1631, %v1709
        %v1711 = vpop.f32.mrb[0].mxu0
        %1712 = vmatprep.mubr.f32.mxu0 0.0
        %v1713 = vand.u32 %v1215, 4294901760
        %1714 = vmatmul.mubr.f32.gmra.mrb[0].mxu0 %v1713
        %v1715 = vpop.f32.mrb[0].mxu0
        %v1716 = vadd.f32 %v1637, %v1715
        %v1717 = vpop.f32.mrb[0].mxu0
        %1718 = vdwg.mxu0
        %v1720 = vsel %vm194, %v192, 0
        %v1723 = vsel %vm194, %v193, 0
        %1725 = vmatprep.subr.mxu0 0.0
        %v1726 = vand.u32 %v184, 4294901760
        %1727 = vmatpush1.msra.mxu0 %v1726
        %1728 = vmatprep.subr.mxu0 0.0
        %v1729 = vand.u32 %v185, 4294901760
        %1730 = vmatpush1.msra.mxu0 %v1729
        %1731 = vmatprep.subr.mxu0 0.0
        %1732 = vmatpush1.msra.mxu0 0.0
        %1733 = vmatprep.subr.mxu0 0.0
        %1734 = vmatpush1.msra.mxu0 0.0
        %1735 = vmatprep.subr.mxu0 0.0
        %1736 = vmatpush1.msra.mxu0 0.0
        %1737 = vmatprep.subr.mxu0 0.0
        %1738 = vmatpush1.msra.mxu0 0.0
        %1739 = vmatprep.subr.mxu0 0.0
        %1740 = vmatpush1.msra.mxu0 0.0
        %1741 = vmatprep.subr.mxu0 0.0
        %1742 = vmatpush1.msra.mxu0 0.0
        %1743 = vmatprep.subr.mxu0 0.0
        %1744 = vmatpush1.msra.mxu0 0.0
        %1745 = vmatprep.subr.mxu0 0.0
        %1746 = vmatpush1.msra.mxu0 0.0
        %1747 = vmatprep.subr.mxu0 0.0
        %1748 = vmatpush1.msra.mxu0 0.0
        %1749 = vmatprep.subr.mxu0 0.0
        %1750 = vmatpush1.msra.mxu0 0.0
        %1751 = vmatprep.subr.mxu0 0.0
        %1752 = vmatpush1.msra.mxu0 0.0
        %1753 = vmatprep.subr.mxu0 0.0
        %1754 = vmatpush1.msra.mxu0 0.0
        %1755 = vmatprep.subr.mxu0 0.0
        %1756 = vmatpush1.msra.mxu0 0.0
        %1757 = vmatprep.subr.mxu0 0.0
        %1758 = vmatpush1.msra.mxu0 0.0
        %1759 = vmatprep.subr.mxu0 0.0
        %1760 = vmatpush1.msra.mxu0 0.0
        %1761 = vmatprep.subr.mxu0 0.0
        %1762 = vmatpush1.msra.mxu0 0.0
        %1763 = vmatprep.subr.mxu0 0.0
        %1764 = vmatpush1.msra.mxu0 0.0
        %1765 = vmatprep.subr.mxu0 0.0
        %1766 = vmatpush1.msra.mxu0 0.0
        %1767 = vmatprep.subr.mxu0 0.0
        %1768 = vmatpush1.msra.mxu0 0.0
        %1769 = vmatprep.subr.mxu0 0.0
        %1770 = vmatpush1.msra.mxu0 0.0
        %1771 = vmatprep.subr.mxu0 0.0
        %1772 = vmatpush1.msra.mxu0 0.0
        %1773 = vmatprep.subr.mxu0 0.0
        %1774 = vmatpush1.msra.mxu0 0.0
        %1775 = vmatprep.subr.mxu0 0.0
        %1776 = vmatpush1.msra.mxu0 0.0
        %1777 = vmatprep.subr.mxu0 0.0
        %1778 = vmatpush1.msra.mxu0 0.0
        %1779 = vmatprep.subr.mxu0 0.0
        %1780 = vmatpush1.msra.mxu0 0.0
        %1781 = vmatprep.subr.mxu0 0.0
        %1782 = vmatpush1.msra.mxu0 0.0
        %1783 = vmatprep.subr.mxu0 0.0
        %1784 = vmatpush1.msra.mxu0 0.0
        %1785 = vmatprep.subr.mxu0 0.0
        %1786 = vmatpush1.msra.mxu0 0.0
        %1787 = vmatprep.subr.mxu0 0.0
        %1788 = vmatpush1.msra.mxu0 0.0
        %1789 = vmatprep.subr.mxu0 0.0
        %1790 = vmatpush1.msra.mxu0 0.0
        %1791 = vmatprep.mubr.f32.mxu0 0.0
        %v1792 = vand.u32 %v1720, 4294901760
        %v1793 = vsub.f32 %v1720, %v1792
        %v1794 = vand.u32 %v1793, 4294901760
        %v1795 = vsub.f32 %v1793, %v1794
        %v1796 = vand.u32 %v1795, 4294901760
        %1797 = vmatmul.mubr.f32.gmra.mrb[0].mxu0 %v1796
        %v1798 = vpop.f32.mrb[0].mxu0
        %v1799 = vadd.f32 0.0, %v1798
        %v1800 = vpop.f32.mrb[0].mxu0
        %1801 = vmatprep.mubr.f32.mxu0 0.0
        %v1802 = vand.u32 %v1723, 4294901760
        %v1803 = vsub.f32 %v1723, %v1802
        %v1804 = vand.u32 %v1803, 4294901760
        %v1805 = vsub.f32 %v1803, %v1804
        %v1806 = vand.u32 %v1805, 4294901760
        %1807 = vmatmul.mubr.f32.gmra.mrb[0].mxu0 %v1806
        %v1808 = vpop.f32.mrb[0].mxu0
        %v1809 = vadd.f32 0.0, %v1808
        %v1810 = vpop.f32.mrb[0].mxu0
        %1811 = vdwg.mxu0
        %1812 = vmatprep.subr.mxu0 0.0
        %v1813 = vand.u32 %v184, 4294901760
        %v1814 = vsub.f32 %v184, %v1813
        %v1815 = vand.u32 %v1814, 4294901760
        %v1816 = vsub.f32 %v1814, %v1815
        %v1817 = vand.u32 %v1816, 4294901760
        %1818 = vmatpush1.msra.mxu0 %v1817
        %1819 = vmatprep.subr.mxu0 0.0
        %v1820 = vand.u32 %v185, 4294901760
        %v1821 = vsub.f32 %v185, %v1820
        %v1822 = vand.u32 %v1821, 4294901760
        %v1823 = vsub.f32 %v1821, %v1822
        %v1824 = vand.u32 %v1823, 4294901760
        %1825 = vmatpush1.msra.mxu0 %v1824
        %1826 = vmatprep.subr.mxu0 0.0
        %1827 = vmatpush1.msra.mxu0 0.0
        %1828 = vmatprep.subr.mxu0 0.0
        %1829 = vmatpush1.msra.mxu0 0.0
        %1830 = vmatprep.subr.mxu0 0.0
        %1831 = vmatpush1.msra.mxu0 0.0
        %1832 = vmatprep.subr.mxu0 0.0
        %1833 = vmatpush1.msra.mxu0 0.0
        %1834 = vmatprep.subr.mxu0 0.0
        %1835 = vmatpush1.msra.mxu0 0.0
        %1836 = vmatprep.subr.mxu0 0.0
        %1837 = vmatpush1.msra.mxu0 0.0
        %1838 = vmatprep.subr.mxu0 0.0
        %1839 = vmatpush1.msra.mxu0 0.0
        %1840 = vmatprep.subr.mxu0 0.0
        %1841 = vmatpush1.msra.mxu0 0.0
        %1842 = vmatprep.subr.mxu0 0.0
        %1843 = vmatpush1.msra.mxu0 0.0
        %1844 = vmatprep.subr.mxu0 0.0
        %1845 = vmatpush1.msra.mxu0 0.0
        %1846 = vmatprep.subr.mxu0 0.0
        %1847 = vmatpush1.msra.mxu0 0.0
        %1848 = vmatprep.subr.mxu0 0.0
        %1849 = vmatpush1.msra.mxu0 0.0
        %1850 = vmatprep.subr.mxu0 0.0
        %1851 = vmatpush1.msra.mxu0 0.0
        %1852 = vmatprep.subr.mxu0 0.0
        %1853 = vmatpush1.msra.mxu0 0.0
        %1854 = vmatprep.subr.mxu0 0.0
        %1855 = vmatpush1.msra.mxu0 0.0
        %1856 = vmatprep.subr.mxu0 0.0
        %1857 = vmatpush1.msra.mxu0 0.0
        %1858 = vmatprep.subr.mxu0 0.0
        %1859 = vmatpush1.msra.mxu0 0.0
        %1860 = vmatprep.subr.mxu0 0.0
        %1861 = vmatpush1.msra.mxu0 0.0
        %1862 = vmatprep.subr.mxu0 0.0
        %1863 = vmatpush1.msra.mxu0 0.0
        %1864 = vmatprep.subr.mxu0 0.0
        %1865 = vmatpush1.msra.mxu0 0.0
        %1866 = vmatprep.subr.mxu0 0.0
        %1867 = vmatpush1.msra.mxu0 0.0
        %1868 = vmatprep.subr.mxu0 0.0
        %1869 = vmatpush1.msra.mxu0 0.0
        %1870 = vmatprep.subr.mxu0 0.0
        %1871 = vmatpush1.msra.mxu0 0.0
        %1872 = vmatprep.subr.mxu0 0.0
        %1873 = vmatpush1.msra.mxu0 0.0
        %1874 = vmatprep.subr.mxu0 0.0
        %1875 = vmatpush1.msra.mxu0 0.0
        %1876 = vmatprep.subr.mxu0 0.0
        %1877 = vmatpush1.msra.mxu0 0.0
        %1878 = vmatprep.subr.mxu0 0.0
        %1879 = vmatpush1.msra.mxu0 0.0
        %1880 = vmatprep.subr.mxu0 0.0
        %1881 = vmatpush1.msra.mxu0 0.0
        %1882 = vmatprep.subr.mxu0 0.0
        %1883 = vmatpush1.msra.mxu0 0.0
        %1884 = vmatprep.subr.mxu0 0.0
        %1885 = vmatpush1.msra.mxu0 0.0
        %1886 = vmatprep.mubr.f32.mxu0 0.0
        %v1887 = vand.u32 %v1720, 4294901760
        %1888 = vmatmul.mubr.f32.gmra.mrb[0].mxu0 %v1887
        %v1889 = vpop.f32.mrb[0].mxu0
        %v1890 = vadd.f32 %v1799, %v1889
        %v1891 = vpop.f32.mrb[0].mxu0
        %1892 = vmatprep.mubr.f32.mxu0 0.0
        %v1893 = vand.u32 %v1723, 4294901760
        %1894 = vmatmul.mubr.f32.gmra.mrb[0].mxu0 %v1893
        %v1895 = vpop.f32.mrb[0].mxu0
        %v1896 = vadd.f32 %v1809, %v1895
        %v1897 = vpop.f32.mrb[0].mxu0
        %1898 = vdwg.mxu0
        %1899 = vmatprep.subr.mxu0 0.0
        %v1900 = vand.u32 %v184, 4294901760
        %v1901 = vsub.f32 %v184, %v1900
        %1902 = vmatpush1.msra.mxu0 %v1901
        %1903 = vmatprep.subr.mxu0 0.0
        %v1904 = vand.u32 %v185, 4294901760
        %v1905 = vsub.f32 %v185, %v1904
        %1906 = vmatpush1.msra.mxu0 %v1905
        %1907 = vmatprep.subr.mxu0 0.0
        %1908 = vmatpush1.msra.mxu0 0.0
        %1909 = vmatprep.subr.mxu0 0.0
        %1910 = vmatpush1.msra.mxu0 0.0
        %1911 = vmatprep.subr.mxu0 0.0
        %1912 = vmatpush1.msra.mxu0 0.0
        %1913 = vmatprep.subr.mxu0 0.0
        %1914 = vmatpush1.msra.mxu0 0.0
        %1915 = vmatprep.subr.mxu0 0.0
        %1916 = vmatpush1.msra.mxu0 0.0
        %1917 = vmatprep.subr.mxu0 0.0
        %1918 = vmatpush1.msra.mxu0 0.0
        %1919 = vmatprep.subr.mxu0 0.0
        %1920 = vmatpush1.msra.mxu0 0.0
        %1921 = vmatprep.subr.mxu0 0.0
        %1922 = vmatpush1.msra.mxu0 0.0
        %1923 = vmatprep.subr.mxu0 0.0
        %1924 = vmatpush1.msra.mxu0 0.0
        %1925 = vmatprep.subr.mxu0 0.0
        %1926 = vmatpush1.msra.mxu0 0.0
        %1927 = vmatprep.subr.mxu0 0.0
        %1928 = vmatpush1.msra.mxu0 0.0
        %1929 = vmatprep.subr.mxu0 0.0
        %1930 = vmatpush1.msra.mxu0 0.0
        %1931 = vmatprep.subr.mxu0 0.0
        %1932 = vmatpush1.msra.mxu0 0.0
        %1933 = vmatprep.subr.mxu0 0.0
        %1934 = vmatpush1.msra.mxu0 0.0
        %1935 = vmatprep.subr.mxu0 0.0
        %1936 = vmatpush1.msra.mxu0 0.0
        %1937 = vmatprep.subr.mxu0 0.0
        %1938 = vmatpush1.msra.mxu0 0.0
        %1939 = vmatprep.subr.mxu0 0.0
        %1940 = vmatpush1.msra.mxu0 0.0
        %1941 = vmatprep.subr.mxu0 0.0
        %1942 = vmatpush1.msra.mxu0 0.0
        %1943 = vmatprep.subr.mxu0 0.0
        %1944 = vmatpush1.msra.mxu0 0.0
        %1945 = vmatprep.subr.mxu0 0.0
        %1946 = vmatpush1.msra.mxu0 0.0
        %1947 = vmatprep.subr.mxu0 0.0
        %1948 = vmatpush1.msra.mxu0 0.0
        %1949 = vmatprep.subr.mxu0 0.0
        %1950 = vmatpush1.msra.mxu0 0.0
        %1951 = vmatprep.subr.mxu0 0.0
        %1952 = vmatpush1.msra.mxu0 0.0
        %1953 = vmatprep.subr.mxu0 0.0
        %1954 = vmatpush1.msra.mxu0 0.0
        %1955 = vmatprep.subr.mxu0 0.0
        %1956 = vmatpush1.msra.mxu0 0.0
        %1957 = vmatprep.subr.mxu0 0.0
        %1958 = vmatpush1.msra.mxu0 0.0
        %1959 = vmatprep.subr.mxu0 0.0
        %1960 = vmatpush1.msra.mxu0 0.0
        %1961 = vmatprep.subr.mxu0 0.0
        %1962 = vmatpush1.msra.mxu0 0.0
        %1963 = vmatprep.subr.mxu0 0.0
        %1964 = vmatpush1.msra.mxu0 0.0
        %1965 = vmatprep.subr.mxu0 0.0
        %1966 = vmatpush1.msra.mxu0 0.0
        %1967 = vmatprep.mubr.f32.mxu0 0.0
        %v1968 = vand.u32 %v1720, 4294901760
        %v1969 = vsub.f32 %v1720, %v1968
        %1970 = vmatmul.mubr.f32.gmra.mrb[0].mxu0 %v1969
        %v1971 = vpop.f32.mrb[0].mxu0
        %v1972 = vadd.f32 %v1890, %v1971
        %v1973 = vpop.f32.mrb[0].mxu0
        %1974 = vmatprep.mubr.f32.mxu0 0.0
        %v1975 = vand.u32 %v1723, 4294901760
        %v1976 = vsub.f32 %v1723, %v1975
        %1977 = vmatmul.mubr.f32.gmra.mrb[0].mxu0 %v1976
        %v1978 = vpop.f32.mrb[0].mxu0
        %v1979 = vadd.f32 %v1896, %v1978
        %v1980 = vpop.f32.mrb[0].mxu0
        %1981 = vdwg.mxu0
        %1982 = vmatprep.subr.mxu0 0.0
        %v1983 = vand.u32 %v184, 4294901760
        %1984 = vmatpush1.msra.mxu0 %v1983
        %1985 = vmatprep.subr.mxu0 0.0
        %v1986 = vand.u32 %v185, 4294901760
        %1987 = vmatpush1.msra.mxu0 %v1986
        %1988 = vmatprep.subr.mxu0 0.0
        %1989 = vmatpush1.msra.mxu0 0.0
        %1990 = vmatprep.subr.mxu0 0.0
        %1991 = vmatpush1.msra.mxu0 0.0
        %1992 = vmatprep.subr.mxu0 0.0
        %1993 = vmatpush1.msra.mxu0 0.0
        %1994 = vmatprep.subr.mxu0 0.0
        %1995 = vmatpush1.msra.mxu0 0.0
        %1996 = vmatprep.subr.mxu0 0.0
        %1997 = vmatpush1.msra.mxu0 0.0
        %1998 = vmatprep.subr.mxu0 0.0
        %1999 = vmatpush1.msra.mxu0 0.0
        %2000 = vmatprep.subr.mxu0 0.0
        %2001 = vmatpush1.msra.mxu0 0.0
        %2002 = vmatprep.subr.mxu0 0.0
        %2003 = vmatpush1.msra.mxu0 0.0
        %2004 = vmatprep.subr.mxu0 0.0
        %2005 = vmatpush1.msra.mxu0 0.0
        %2006 = vmatprep.subr.mxu0 0.0
        %2007 = vmatpush1.msra.mxu0 0.0
        %2008 = vmatprep.subr.mxu0 0.0
        %2009 = vmatpush1.msra.mxu0 0.0
        %2010 = vmatprep.subr.mxu0 0.0
        %2011 = vmatpush1.msra.mxu0 0.0
        %2012 = vmatprep.subr.mxu0 0.0
        %2013 = vmatpush1.msra.mxu0 0.0
        %2014 = vmatprep.subr.mxu0 0.0
        %2015 = vmatpush1.msra.mxu0 0.0
        %2016 = vmatprep.subr.mxu0 0.0
        %2017 = vmatpush1.msra.mxu0 0.0
        %2018 = vmatprep.subr.mxu0 0.0
        %2019 = vmatpush1.msra.mxu0 0.0
        %2020 = vmatprep.subr.mxu0 0.0
        %2021 = vmatpush1.msra.mxu0 0.0
        %2022 = vmatprep.subr.mxu0 0.0
        %2023 = vmatpush1.msra.mxu0 0.0
        %2024 = vmatprep.subr.mxu0 0.0
        %2025 = vmatpush1.msra.mxu0 0.0
        %2026 = vmatprep.subr.mxu0 0.0
        %2027 = vmatpush1.msra.mxu0 0.0
        %2028 = vmatprep.subr.mxu0 0.0
        %2029 = vmatpush1.msra.mxu0 0.0
        %2030 = vmatprep.subr.mxu0 0.0
        %2031 = vmatpush1.msra.mxu0 0.0
        %2032 = vmatprep.subr.mxu0 0.0
        %2033 = vmatpush1.msra.mxu0 0.0
        %2034 = vmatprep.subr.mxu0 0.0
        %2035 = vmatpush1.msra.mxu0 0.0
        %2036 = vmatprep.subr.mxu0 0.0
        %2037 = vmatpush1.msra.mxu0 0.0
        %2038 = vmatprep.subr.mxu0 0.0
        %2039 = vmatpush1.msra.mxu0 0.0
        %2040 = vmatprep.subr.mxu0 0.0
        %2041 = vmatpush1.msra.mxu0 0.0
        %2042 = vmatprep.subr.mxu0 0.0
        %2043 = vmatpush1.msra.mxu0 0.0
        %2044 = vmatprep.subr.mxu0 0.0
        %2045 = vmatpush1.msra.mxu0 0.0
        %2046 = vmatprep.subr.mxu0 0.0
        %2047 = vmatpush1.msra.mxu0 0.0
        %2048 = vmatprep.mubr.f32.mxu0 0.0
        %v2049 = vand.u32 %v1720, 4294901760
        %v2050 = vsub.f32 %v1720, %v2049
        %v2051 = vand.u32 %v2050, 4294901760
        %2052 = vmatmul.mubr.f32.gmra.mrb[0].mxu0 %v2051
        %v2053 = vpop.f32.mrb[0].mxu0
        %v2054 = vadd.f32 %v1972, %v2053
        %v2055 = vpop.f32.mrb[0].mxu0
        %2056 = vmatprep.mubr.f32.mxu0 0.0
        %v2057 = vand.u32 %v1723, 4294901760
        %v2058 = vsub.f32 %v1723, %v2057
        %v2059 = vand.u32 %v2058, 4294901760
        %2060 = vmatmul.mubr.f32.gmra.mrb[0].mxu0 %v2059
        %v2061 = vpop.f32.mrb[0].mxu0
        %v2062 = vadd.f32 %v1979, %v2061
        %v2063 = vpop.f32.mrb[0].mxu0
        %2064 = vdwg.mxu0
        %2065 = vmatprep.subr.mxu0 0.0
        %v2066 = vand.u32 %v184, 4294901760
        %v2067 = vsub.f32 %v184, %v2066
        %v2068 = vand.u32 %v2067, 4294901760
        %2069 = vmatpush1.msra.mxu0 %v2068
        %2070 = vmatprep.subr.mxu0 0.0
        %v2071 = vand.u32 %v185, 4294901760
        %v2072 = vsub.f32 %v185, %v2071
        %v2073 = vand.u32 %v2072, 4294901760
        %2074 = vmatpush1.msra.mxu0 %v2073
        %2075 = vmatprep.subr.mxu0 0.0
        %2076 = vmatpush1.msra.mxu0 0.0
        %2077 = vmatprep.subr.mxu0 0.0
        %2078 = vmatpush1.msra.mxu0 0.0
        %2079 = vmatprep.subr.mxu0 0.0
        %2080 = vmatpush1.msra.mxu0 0.0
        %2081 = vmatprep.subr.mxu0 0.0
        %2082 = vmatpush1.msra.mxu0 0.0
        %2083 = vmatprep.subr.mxu0 0.0
        %2084 = vmatpush1.msra.mxu0 0.0
        %2085 = vmatprep.subr.mxu0 0.0
        %2086 = vmatpush1.msra.mxu0 0.0
        %2087 = vmatprep.subr.mxu0 0.0
        %2088 = vmatpush1.msra.mxu0 0.0
        %2089 = vmatprep.subr.mxu0 0.0
        %2090 = vmatpush1.msra.mxu0 0.0
        %2091 = vmatprep.subr.mxu0 0.0
        %2092 = vmatpush1.msra.mxu0 0.0
        %2093 = vmatprep.subr.mxu0 0.0
        %2094 = vmatpush1.msra.mxu0 0.0
        %2095 = vmatprep.subr.mxu0 0.0
        %2096 = vmatpush1.msra.mxu0 0.0
        %2097 = vmatprep.subr.mxu0 0.0
        %2098 = vmatpush1.msra.mxu0 0.0
        %2099 = vmatprep.subr.mxu0 0.0
        %2100 = vmatpush1.msra.mxu0 0.0
        %2101 = vmatprep.subr.mxu0 0.0
        %2102 = vmatpush1.msra.mxu0 0.0
        %2103 = vmatprep.subr.mxu0 0.0
        %2104 = vmatpush1.msra.mxu0 0.0
        %2105 = vmatprep.subr.mxu0 0.0
        %2106 = vmatpush1.msra.mxu0 0.0
        %2107 = vmatprep.subr.mxu0 0.0
        %2108 = vmatpush1.msra.mxu0 0.0
        %2109 = vmatprep.subr.mxu0 0.0
        %2110 = vmatpush1.msra.mxu0 0.0
        %2111 = vmatprep.subr.mxu0 0.0
        %2112 = vmatpush1.msra.mxu0 0.0
        %2113 = vmatprep.subr.mxu0 0.0
        %2114 = vmatpush1.msra.mxu0 0.0
        %2115 = vmatprep.subr.mxu0 0.0
        %2116 = vmatpush1.msra.mxu0 0.0
        %2117 = vmatprep.subr.mxu0 0.0
        %2118 = vmatpush1.msra.mxu0 0.0
        %2119 = vmatprep.subr.mxu0 0.0
        %2120 = vmatpush1.msra.mxu0 0.0
        %2121 = vmatprep.subr.mxu0 0.0
        %2122 = vmatpush1.msra.mxu0 0.0
        %2123 = vmatprep.subr.mxu0 0.0
        %2124 = vmatpush1.msra.mxu0 0.0
        %2125 = vmatprep.subr.mxu0 0.0
        %2126 = vmatpush1.msra.mxu0 0.0
        %2127 = vmatprep.subr.mxu0 0.0
        %2128 = vmatpush1.msra.mxu0 0.0
        %2129 = vmatprep.subr.mxu0 0.0
        %2130 = vmatpush1.msra.mxu0 0.0
        %2131 = vmatprep.subr.mxu0 0.0
        %2132 = vmatpush1.msra.mxu0 0.0
        %2133 = vmatprep.subr.mxu0 0.0
        %2134 = vmatpush1.msra.mxu0 0.0
        %2135 = vmatprep.mubr.f32.mxu0 0.0
        %v2136 = vand.u32 %v1720, 4294901760
        %2137 = vmatmul.mubr.f32.gmra.mrb[0].mxu0 %v2136
        %v2138 = vpop.f32.mrb[0].mxu0
        %v2139 = vadd.f32 %v2054, %v2138
        %v2140 = vpop.f32.mrb[0].mxu0
        %2141 = vmatprep.mubr.f32.mxu0 0.0
        %v2142 = vand.u32 %v1723, 4294901760
        %2143 = vmatmul.mubr.f32.gmra.mrb[0].mxu0 %v2142
        %v2144 = vpop.f32.mrb[0].mxu0
        %v2145 = vadd.f32 %v2062, %v2144
        %v2146 = vpop.f32.mrb[0].mxu0
        %2147 = vdwg.mxu0
        %2148 = vmatprep.subr.mxu0 0.0
        %v2149 = vand.u32 %v184, 4294901760
        %2150 = vmatpush1.msra.mxu0 %v2149
        %2151 = vmatprep.subr.mxu0 0.0
        %v2152 = vand.u32 %v185, 4294901760
        %2153 = vmatpush1.msra.mxu0 %v2152
        %2154 = vmatprep.subr.mxu0 0.0
        %2155 = vmatpush1.msra.mxu0 0.0
        %2156 = vmatprep.subr.mxu0 0.0
        %2157 = vmatpush1.msra.mxu0 0.0
        %2158 = vmatprep.subr.mxu0 0.0
        %2159 = vmatpush1.msra.mxu0 0.0
        %2160 = vmatprep.subr.mxu0 0.0
        %2161 = vmatpush1.msra.mxu0 0.0
        %2162 = vmatprep.subr.mxu0 0.0
        %2163 = vmatpush1.msra.mxu0 0.0
        %2164 = vmatprep.subr.mxu0 0.0
        %2165 = vmatpush1.msra.mxu0 0.0
        %2166 = vmatprep.subr.mxu0 0.0
        %2167 = vmatpush1.msra.mxu0 0.0
        %2168 = vmatprep.subr.mxu0 0.0
        %2169 = vmatpush1.msra.mxu0 0.0
        %2170 = vmatprep.subr.mxu0 0.0
        %2171 = vmatpush1.msra.mxu0 0.0
        %2172 = vmatprep.subr.mxu0 0.0
        %2173 = vmatpush1.msra.mxu0 0.0
        %2174 = vmatprep.subr.mxu0 0.0
        %2175 = vmatpush1.msra.mxu0 0.0
        %2176 = vmatprep.subr.mxu0 0.0
        %2177 = vmatpush1.msra.mxu0 0.0
        %2178 = vmatprep.subr.mxu0 0.0
        %2179 = vmatpush1.msra.mxu0 0.0
        %2180 = vmatprep.subr.mxu0 0.0
        %2181 = vmatpush1.msra.mxu0 0.0
        %2182 = vmatprep.subr.mxu0 0.0
        %2183 = vmatpush1.msra.mxu0 0.0
        %2184 = vmatprep.subr.mxu0 0.0
        %2185 = vmatpush1.msra.mxu0 0.0
        %2186 = vmatprep.subr.mxu0 0.0
        %2187 = vmatpush1.msra.mxu0 0.0
        %2188 = vmatprep.subr.mxu0 0.0
        %2189 = vmatpush1.msra.mxu0 0.0
        %2190 = vmatprep.subr.mxu0 0.0
        %2191 = vmatpush1.msra.mxu0 0.0
        %2192 = vmatprep.subr.mxu0 0.0
        %2193 = vmatpush1.msra.mxu0 0.0
        %2194 = vmatprep.subr.mxu0 0.0
        %2195 = vmatpush1.msra.mxu0 0.0
        %2196 = vmatprep.subr.mxu0 0.0
        %2197 = vmatpush1.msra.mxu0 0.0
        %2198 = vmatprep.subr.mxu0 0.0
        %2199 = vmatpush1.msra.mxu0 0.0
        %2200 = vmatprep.subr.mxu0 0.0
        %2201 = vmatpush1.msra.mxu0 0.0
        %2202 = vmatprep.subr.mxu0 0.0
        %2203 = vmatpush1.msra.mxu0 0.0
        %2204 = vmatprep.subr.mxu0 0.0
        %2205 = vmatpush1.msra.mxu0 0.0
        %2206 = vmatprep.subr.mxu0 0.0
        %2207 = vmatpush1.msra.mxu0 0.0
        %2208 = vmatprep.subr.mxu0 0.0
        %2209 = vmatpush1.msra.mxu0 0.0
        %2210 = vmatprep.subr.mxu0 0.0
        %2211 = vmatpush1.msra.mxu0 0.0
        %2212 = vmatprep.subr.mxu0 0.0
        %2213 = vmatpush1.msra.mxu0 0.0
        %2214 = vmatprep.mubr.f32.mxu0 0.0
        %v2215 = vand.u32 %v1720, 4294901760
        %2216 = vmatmul.mubr.f32.gmra.mrb[0].mxu0 %v2215
        %v2217 = vpop.f32.mrb[0].mxu0
        %v2218 = vadd.f32 %v2139, %v2217
        %v2219 = vpop.f32.mrb[0].mxu0
        %2220 = vmatprep.mubr.f32.mxu0 0.0
        %v2221 = vand.u32 %v1723, 4294901760
        %2222 = vmatmul.mubr.f32.gmra.mrb[0].mxu0 %v2221
        %v2223 = vpop.f32.mrb[0].mxu0
        %v2224 = vadd.f32 %v2145, %v2223
        %v2225 = vpop.f32.mrb[0].mxu0
        %2226 = vdwg.mxu0
        %vm2227 = vcmask 132096
        %2228 = vst.msk [vmem:[#allocation2] sm:$0x3] %vm2227, 0.0
        %2229 = vst.msk [vmem:[#allocation2 + $0x18] sm:$0x3] %vm2227, 0.0
        %2230 = vst.msk [vmem:[#allocation2 + $0x30] sm:$0x3] %vm2227, 0.0
        %2231 = vst.msk [vmem:[#allocation2 + $0x48] sm:$0x3] %vm2227, 0.0
        %2232 = vst.msk [vmem:[#allocation2 + $0x12] sm:$0x3] %vm2227, 0.0
        %2233 = vst.msk [vmem:[#allocation2 + $0x2a] sm:$0x3] %vm2227, 0.0
        %2234 = vst.msk [vmem:[#allocation2 + $0x42] sm:$0x3] %vm2227, 0.0
        %2235 = vst.msk [vmem:[#allocation2 + $0x5a] sm:$0x3] %vm2227, 0.0
        %vm2236 = vcmask 138240
        %2237 = vst.msk [vmem:[#allocation2 + $0x2] sm:$0xff] %vm2236, %v694
        %2238 = vst.msk [vmem:[#allocation2 + $0xa] sm:$0xff] %vm2236, %v700
        %2239 = vst.msk [vmem:[#allocation2 + $0x1a] sm:$0xff] %vm2236, %v1202
        %2240 = vst.msk [vmem:[#allocation2 + $0x22] sm:$0xff] %vm2236, %v1208
        %2241 = vst.msk [vmem:[#allocation2 + $0x32] sm:$0xff] %vm2236, %v1710
        %2242 = vst.msk [vmem:[#allocation2 + $0x3a] sm:$0xff] %vm2236, %v1716
        %2243 = vst.msk [vmem:[#allocation2 + $0x4a] sm:$0xff] %vm2236, %v2218
        %2244 = vst.msk [vmem:[#allocation2 + $0x52] sm:$0xff] %vm2236, %v2224
        %v2245 = vld [vmem:[#allocation2] sm:$0xff]
        %v2246 = vld [vmem:[#allocation2 + $0x8] sm:$0xff]
        %v2247 = vld [vmem:[#allocation2 + $0x10] sm:$0x1]
        %v2248 = vld [vmem:[#allocation2 + $0x18] sm:$0xff]
        %v2249 = vld [vmem:[#allocation2 + $0x20] sm:$0xff]
        %v2250 = vld [vmem:[#allocation2 + $0x28] sm:$0x1]
        %v2251 = vld [vmem:[#allocation2 + $0x30] sm:$0xff]
        %v2252 = vld [vmem:[#allocation2 + $0x38] sm:$0xff]
        %v2253 = vld [vmem:[#allocation2 + $0x40] sm:$0x1]
        %v2254 = vld [vmem:[#allocation2 + $0x48] sm:$0xff]
        %v2255 = vld [vmem:[#allocation2 + $0x50] sm:$0xff]
        %v2256 = vld [vmem:[#allocation2 + $0x58] sm:$0x1]
        %v2257 = vmul.f32 %v2245, 0.125
        %v2258 = vmul.f32 %v2246, 0.125
        %v2259 = vmul.f32 %v2247, 0.125
        %v2260 = vmul.f32 %v2248, 0.125
        %v2261 = vmul.f32 %v2249, 0.125
        %v2262 = vmul.f32 %v2250, 0.125
        %v2263 = vmul.f32 %v2251, 0.125
        %v2264 = vmul.f32 %v2252, 0.125
        %v2265 = vmul.f32 %v2253, 0.125
        %v2266 = vmul.f32 %v2254, 0.125
        %v2267 = vmul.f32 %v2255, 0.125
        %v2268 = vmul.f32 %v2256, 0.125
        %v2269 = vld [vmem:[#allocation2 + $0x1] sm:$0xff]
        %v2270 = vld [vmem:[#allocation2 + $0x9] sm:$0xff]
        %v2271 = vld [vmem:[#allocation2 + $0x11] sm:$0x1]
        %v2272 = vld [vmem:[#allocation2 + $0x19] sm:$0xff]
        %v2273 = vld [vmem:[#allocation2 + $0x21] sm:$0xff]
        %v2274 = vld [vmem:[#allocation2 + $0x29] sm:$0x1]
        %v2275 = vld [vmem:[#allocation2 + $0x31] sm:$0xff]
        %v2276 = vld [vmem:[#allocation2 + $0x39] sm:$0xff]
        %v2277 = vld [vmem:[#allocation2 + $0x41] sm:$0x1]
        %v2278 = vld [vmem:[#allocation2 + $0x49] sm:$0xff]
        %v2279 = vld [vmem:[#allocation2 + $0x51] sm:$0xff]
        %v2280 = vld [vmem:[#allocation2 + $0x59] sm:$0x1]
        %v2281 = vmul.f32 %v2269, 0.375
        %v2282 = vmul.f32 %v2270, 0.375
        %v2283 = vmul.f32 %v2271, 0.375
        %v2284 = vmul.f32 %v2272, 0.375
        %v2285 = vmul.f32 %v2273, 0.375
        %v2286 = vmul.f32 %v2274, 0.375
        %v2287 = vmul.f32 %v2275, 0.375
        %v2288 = vmul.f32 %v2276, 0.375
        %v2289 = vmul.f32 %v2277, 0.375
        %v2290 = vmul.f32 %v2278, 0.375
        %v2291 = vmul.f32 %v2279, 0.375
        %v2292 = vmul.f32 %v2280, 0.375
        %v2293 = vadd.f32 %v2257, %v2281
        %v2294 = vadd.f32 %v2258, %v2282
        %v2295 = vadd.f32 %v2259, %v2283
        %v2296 = vadd.f32 %v2260, %v2284
        %v2297 = vadd.f32 %v2261, %v2285
        %v2298 = vadd.f32 %v2262, %v2286
        %v2299 = vadd.f32 %v2263, %v2287
        %v2300 = vadd.f32 %v2264, %v2288
        %v2301 = vadd.f32 %v2265, %v2289
        %v2302 = vadd.f32 %v2266, %v2290
        %v2303 = vadd.f32 %v2267, %v2291
        %v2304 = vadd.f32 %v2268, %v2292
        %v2305 = vld [vmem:[#allocation2 + $0x2] sm:$0xff]
        %v2306 = vld [vmem:[#allocation2 + $0xa] sm:$0xff]
        %v2307 = vld [vmem:[#allocation2 + $0x12] sm:$0x1]
        %v2308 = vld [vmem:[#allocation2 + $0x1a] sm:$0xff]
        %v2309 = vld [vmem:[#allocation2 + $0x22] sm:$0xff]
        %v2310 = vld [vmem:[#allocation2 + $0x2a] sm:$0x1]
        %v2311 = vld [vmem:[#allocation2 + $0x32] sm:$0xff]
        %v2312 = vld [vmem:[#allocation2 + $0x3a] sm:$0xff]
        %v2313 = vld [vmem:[#allocation2 + $0x42] sm:$0x1]
        %v2314 = vld [vmem:[#allocation2 + $0x4a] sm:$0xff]
        %v2315 = vld [vmem:[#allocation2 + $0x52] sm:$0xff]
        %v2316 = vld [vmem:[#allocation2 + $0x5a] sm:$0x1]
        %v2317 = vmul.f32 %v2305, 0.375
        %v2318 = vmul.f32 %v2306, 0.375
        %v2319 = vmul.f32 %v2307, 0.375
        %v2320 = vmul.f32 %v2308, 0.375
        %v2321 = vmul.f32 %v2309, 0.375
        %v2322 = vmul.f32 %v2310, 0.375
        %v2323 = vmul.f32 %v2311, 0.375
        %v2324 = vmul.f32 %v2312, 0.375
        %v2325 = vmul.f32 %v2313, 0.375
        %v2326 = vmul.f32 %v2314, 0.375
        %v2327 = vmul.f32 %v2315, 0.375
        %v2328 = vmul.f32 %v2316, 0.375
        %v2329 = vadd.f32 %v2293, %v2317
        %v2330 = vadd.f32 %v2294, %v2318
        %v2331 = vadd.f32 %v2295, %v2319
        %v2332 = vadd.f32 %v2296, %v2320
        %v2333 = vadd.f32 %v2297, %v2321
        %v2334 = vadd.f32 %v2298, %v2322
        %v2335 = vadd.f32 %v2299, %v2323
        %v2336 = vadd.f32 %v2300, %v2324
        %v2337 = vadd.f32 %v2301, %v2325
        %v2338 = vadd.f32 %v2302, %v2326
        %v2339 = vadd.f32 %v2303, %v2327
        %v2340 = vadd.f32 %v2304, %v2328
        %v2341 = vld [vmem:[#allocation2 + $0x3] sm:$0xff]
        %v2342 = vld [vmem:[#allocation2 + $0xb] sm:$0xff]
        %v2343 = vld [vmem:[#allocation2 + $0x13] sm:$0x1]
        %v2344 = vld [vmem:[#allocation2 + $0x1b] sm:$0xff]
        %v2345 = vld [vmem:[#allocation2 + $0x23] sm:$0xff]
        %v2346 = vld [vmem:[#allocation2 + $0x2b] sm:$0x1]
        %v2347 = vld [vmem:[#allocation2 + $0x33] sm:$0xff]
        %v2348 = vld [vmem:[#allocation2 + $0x3b] sm:$0xff]
        %v2349 = vld [vmem:[#allocation2 + $0x43] sm:$0x1]
        %v2350 = vld [vmem:[#allocation2 + $0x4b] sm:$0xff]
        %v2351 = vld [vmem:[#allocation2 + $0x53] sm:$0xff]
        %v2352 = vld [vmem:[#allocation2 + $0x5b] sm:$0x1]
        %v2353 = vmul.f32 %v2341, 0.125
        %v2354 = vmul.f32 %v2342, 0.125
        %v2355 = vmul.f32 %v2343, 0.125
        %v2356 = vmul.f32 %v2344, 0.125
        %v2357 = vmul.f32 %v2345, 0.125
        %v2358 = vmul.f32 %v2346, 0.125
        %v2359 = vmul.f32 %v2347, 0.125
        %v2360 = vmul.f32 %v2348, 0.125
        %v2361 = vmul.f32 %v2349, 0.125
        %v2362 = vmul.f32 %v2350, 0.125
        %v2363 = vmul.f32 %v2351, 0.125
        %v2364 = vmul.f32 %v2352, 0.125
        %v2365 = vadd.f32 %v2329, %v2353
        %v2366 = vadd.f32 %v2330, %v2354
        %v2367 = vadd.f32 %v2331, %v2355
        %v2368 = vadd.f32 %v2332, %v2356
        %v2369 = vadd.f32 %v2333, %v2357
        %v2370 = vadd.f32 %v2334, %v2358
        %v2371 = vadd.f32 %v2335, %v2359
        %v2372 = vadd.f32 %v2336, %v2360
        %v2373 = vadd.f32 %v2337, %v2361
        %v2374 = vadd.f32 %v2338, %v2362
        %v2375 = vadd.f32 %v2339, %v2363
        %v2376 = vadd.f32 %v2340, %v2364
        %2377 = vst.msk [vmem:[%s182] sm:$0xff] %vm2236, %v2365
        %2378 = vst.msk [vmem:[%s182 + $0x8] sm:$0xff] %vm2236, %v2366
        %vm2379 = vcmask 131072
        %2380 = vst.msk [vmem:[%s182 + $0x10] sm:$0x1] %vm2379, %v2367
        %2381 = vst.msk [vmem:[%s182 + $0x18] sm:$0xff] %vm2236, %v2368
        %2382 = vst.msk [vmem:[%s182 + $0x20] sm:$0xff] %vm2236, %v2369
        %2383 = vst.msk [vmem:[%s182 + $0x28] sm:$0x1] %vm2379, %v2370
        %2384 = vst.msk [vmem:[%s182 + $0x30] sm:$0xff] %vm2236, %v2371
        %2385 = vst.msk [vmem:[%s182 + $0x38] sm:$0xff] %vm2236, %v2372
        %2386 = vst.msk [vmem:[%s182 + $0x40] sm:$0x1] %vm2379, %v2373
        %2387 = vst.msk [vmem:[%s182 + $0x48] sm:$0xff] %vm2236, %v2374
        %2388 = vst.msk [vmem:[%s182 + $0x50] sm:$0xff] %vm2236, %v2375
        %2389 = vst.msk [vmem:[%s182 + $0x58] sm:$0x1] %vm2379, %v2376
        %s2390 = smul.u32 4, %s17
        %p2391 = scmp.lt.s32.totalorder %s2390, 7
        %s2392 = scalar_select %p2391, %s2390, 7
        %s2393 = smul.addr %s2392, 3
        %s2394 = smul.addr %s2393, 8
        %s2395 = scalar_lea.vmem %s2, %s2394
        // Predicated region
        $region37: #{tpu_custom_call.1} parent=27 // pred_check
          %p2396 = pneg %p82
        $region38: #{tpu_custom_call.1} parent=27 // pred_check_branch
          %2398 = sbr.rel (%p2396) target = $region40
        $region39: #{tpu_custom_call.1} parent=27 // pred_region
          %s2399 = smul.u32 4, %s17
        $region40: #{tpu_custom_call.1} parent=27 // pred_fallthru
          _
      $region28: #{tpu_custom_call.1} parent=5 // pred_fallthru
        _
      %p2400 = scmp.le.s32.totalorder 2, %s12
      // Predicated region
      $region41: #{tpu_custom_call.1} parent=5 // pred_check
        %p2401 = pneg %p2400
      $region42: #{tpu_custom_call.1} parent=5 // pred_check_branch
        %2403 = sbr.rel (%p2401) target = $region44
      $region43: #{tpu_custom_call.1} parent=5 // pred_region
        %s2404 = ssub.s32 %s12, 2
        // Predicated region
        $region45: #{tpu_custom_call.1} parent=43 // pred_check
          %p2405 = pneg %p88
        $region46: #{tpu_custom_call.1} parent=43 // pred_check_branch
          %2407 = sbr.rel (%p2405) target = $region48
        $region47: #{tpu_custom_call.1} parent=43 // pred_region
          %s2408 = smul.u32 4, %s18
          %p2409 = scmp.lt.s32.totalorder %s2408, 7
          %s2410 = scalar_select %p2409, %s2408, 7
          %s2411 = smul.addr %s2410, 3
          %s2412 = smul.addr %s2411, 8
          %s2413 = scalar_lea.vmem %s2, %s2412
        $region48: #{tpu_custom_call.1} parent=43 // pred_fallthru
          _
      $region44: #{tpu_custom_call.1} parent=5 // pred_fallthru
        _
    $region6: #{tpu_custom_call.1} parent=1 // loop_footer
      %s16 = sadd.s32 1, %s12
    $region7: #{tpu_custom_call.1} parent=1 // loop_footer_branch
      %11 = sbr.rel target = $region3
    $region8: #{tpu_custom_call.1} parent=1 // loop_exit
      _
    %2414 = vsyncpa [#allocation4], 1
    %s2415 = scalar_lea.sflag [#allocation4], 1
    %2416 = vsyncpa %s2415, 1
    %2417 = vsyncpa [#allocation6], 1

</llo_original>
